<compile_context>
chip_gen: v7x
topology: tpu7x:2x2x1
jax: 0.10.0
libtpu: 0.0.40
codegen_flags: <defaults>
</compile_context>

<pallas_src>
import jax
import jax.numpy as jnp
from jax.experimental import pallas as pl
from jax.experimental.pallas import tpu as pltpu


# ------------------------------------------------------------------ helpers --
def _layernorm(t, gamma, beta, eps=1e-5):
    """LayerNorm over the last axis (matches torch.nn.LayerNorm, eps=1e-5)."""
    mu = jnp.mean(t, axis=-1, keepdims=True)
    c = t - mu
    var = jnp.mean(c * c, axis=-1, keepdims=True)
    return c * jax.lax.rsqrt(var + eps) * gamma + beta


def _erf(z):
    # Abramowitz & Stegun 7.1.26 rational approximation, |err| <= 1.5e-7.
    # Only polynomial VPU math + one EUP exp -> guaranteed Mosaic lowering.
    a1, a2, a3, a4, a5 = (0.254829592, -0.284496736, 1.421413741,
                          -1.453152027, 1.061405429)
    p = 0.3275911
    az = jnp.abs(z)
    t = 1.0 / (1.0 + p * az)
    poly = ((((a5 * t + a4) * t + a3) * t + a2) * t + a1) * t
    y = 1.0 - poly * jnp.exp(-az * az)
    return jnp.where(z < 0.0, -y, y)


def _gelu(z):
    """Exact (erf-based) GELU, matching PyTorch nn.GELU() default."""
    return 0.5 * z * (1.0 + _erf(z * 0.7071067811865476))


# ------------------------------------------------------------------- kernel --
def token_transformer_kernel(x_ref, g1_ref, b1_ref,
                             wq_ref, wk_ref, wv_ref,
                             wp_ref, bp_ref,
                             g2_ref, b2_ref,
                             w1_ref, bm1_ref, w2_ref, bm2_ref,
                             o_ref):
    Bx, Nx, D = x_ref.shape
    IN = wq_ref.shape[1]
    scale = 1.0 / (D ** 0.5)      # qk_scale=None -> (dim // num_heads) ** -0.5, num_heads == 1

    # Flatten tokens: one tall (B*N, D) operand feeds every projection.
    x = x_ref[...].reshape(Bx * Nx, D)

    # ---- norm1 (over `dim`) ----
    h = _layernorm(x, g1_ref[...], b1_ref[...])

    # ---- QKV projection (weights pre-split host-side; qkv_bias=False) ----
    q = jnp.dot(h, wq_ref[...], preferred_element_type=jnp.float32)      # (B*N, IN)
    k = jnp.dot(h, wk_ref[...], preferred_element_type=jnp.float32)
    v = jnp.dot(h, wv_ref[...], preferred_element_type=jnp.float32)

    qb = q.reshape(Bx, Nx, IN)    # splitting the major dim is layout-preserving
    kb = k.reshape(Bx, Nx, IN)
    vb = v.reshape(Bx, Nx, IN)

    # ---- attention: batched over B, contraction on the trailing axis (no explicit .T) ----
    s = jnp.einsum('bnd,bmd->bnm', qb, kb,
                   preferred_element_type=jnp.float32) * scale           # (B, N, N)
    s = s - jnp.max(s, axis=-1, keepdims=True)
    p = jnp.exp(s)
    p = p * pl.reciprocal(jnp.sum(p, axis=-1, keepdims=True), approx=True)
    a = jnp.einsum('bnm,bmd->bnd', p, vb,
                   preferred_element_type=jnp.float32)                   # (B, N, IN)
    a = a.reshape(Bx * Nx, IN)

    # ---- output projection + T2T residual: v.squeeze(1) + proj(attn @ v) ----
    y = jnp.dot(a, wp_ref[...], preferred_element_type=jnp.float32) + bp_ref[...]
    y = v + y

    # ---- norm2 (over `in_dim`) + MLP (Linear -> exact GELU -> Linear) + residual ----
    h2 = _layernorm(y, g2_ref[...], b2_ref[...])
    m = jnp.dot(h2, w1_ref[...], preferred_element_type=jnp.float32) + bm1_ref[...]
    m = _gelu(m)
    m = jnp.dot(m, w2_ref[...], preferred_element_type=jnp.float32) + bm2_ref[...]
    out = y + m

    o_ref[...] = out.reshape(Bx, Nx, IN).astype(o_ref.dtype)


# ------------------------------------------------------------------ wrapper --
def token_transformer(x, g1, b1, wq, wk, wv, wp, bp, g2, b2, w1, bm1, w2, bm2):
    Bx, Nx, D = x.shape
    IN = wq.shape[1]
    H = w1.shape[1]

    def full_block(shape):
        n = len(shape)
        return pl.BlockSpec(shape, lambda i, _n=n: (0,) * _n)

    return pl.pallas_call(
        token_transformer_kernel,
        out_shape=jax.ShapeDtypeStruct((Bx, Nx, IN), x.dtype),
        grid=(1,),                 # single fused step: per-step overhead >> compute here
        in_specs=[
            full_block((Bx, Nx, D)),                                          # x
            full_block((1, D)), full_block((1, D)),                           # norm1 gamma / beta
            full_block((D, IN)), full_block((D, IN)), full_block((D, IN)),    # Wq / Wk / Wv
            full_block((IN, IN)), full_block((1, IN)),                        # Wproj / bproj
            full_block((1, IN)), full_block((1, IN)),                         # norm2 gamma / beta
            full_block((IN, H)), full_block((1, H)),                          # mlp fc1 W / b
            full_block((H, IN)), full_block((1, IN)),                         # mlp fc2 W / b
        ],
        out_specs=full_block((Bx, Nx, IN)),
        compiler_params=pltpu.CompilerParams(
            dimension_semantics=("arbitrary",)),
    )(x, g1, b1, wq, wk, wv, wp, bp, g2, b2, w1, bm1, w2, bm2)


# ---------------------------------------------------------------- reference --
def reference(x, g1, b1, wq, wk, wv, wp, bp, g2, b2, w1, bm1, w2, bm2):
    """Pure-JAX reproduction of the PyTorch Token_transformer forward (eval mode)."""
    Bx, Nx, D = x.shape
    scale = 1.0 / (D ** 0.5)

    def ln(t, g, b):
        mu = jnp.mean(t, axis=-1, keepdims=True)
        var = jnp.mean((t - mu) ** 2, axis=-1, keepdims=True)
        return (t - mu) / jnp.sqrt(var + 1e-5) * g + b

    h = ln(x, g1[0], b1[0])
    q = h @ wq
    k = h @ wk
    v = h @ wv
    attn = jnp.einsum('bnd,bmd->bnm', q, k) * scale
    attn = jax.nn.softmax(attn, axis=-1)
    a = jnp.einsum('bnm,bmd->bnd', attn, v)
    y = v + (a @ wp + bp[0])
    m = jax.nn.gelu(ln(y, g2[0], b2[0]) @ w1 + bm1[0], approximate=False)
    m = m @ w2 + bm2[0]
    return y + m


# -------------------------------------------------------------------- main ---
if __name__ == "__main__":
    # Small test shapes consistent with the module (num_heads must be 1, mlp_ratio=1.0).
    # in_dim chosen as 128 so every activation/output store is lane-dense.
    B, N, DIM, IN_DIM = 2, 16, 64, 128
    HID = int(IN_DIM * 1.0)                      # mlp_ratio = 1.0

    key = jax.random.PRNGKey(0)
    ks = jax.random.split(key, 14)

    x   = jax.random.normal(ks[0], (B, N, DIM), dtype=jnp.float32)
    g1  = 1.0 + 0.1 * jax.random.normal(ks[1], (1, DIM), dtype=jnp.float32)
    bt1 = 0.1 * jax.random.normal(ks[2], (1, DIM), dtype=jnp.float32)
    # qkv.weight (3*in_dim, dim) transposed + split host-side -> Wq/Wk/Wv of shape (dim, in_dim),
    # so the kernel computes y = x @ W (matching PyTorch's x @ W.T).  qkv_bias=False.
    wq  = 0.05 * jax.random.normal(ks[3], (DIM, IN_DIM), dtype=jnp.float32)
    wk  = 0.05 * jax.random.normal(ks[4], (DIM, IN_DIM), dtype=jnp.float32)
    wv  = 0.05 * jax.random.normal(ks[5], (DIM, IN_DIM), dtype=jnp.float32)
    wp  = 0.05 * jax.random.normal(ks[6], (IN_DIM, IN_DIM), dtype=jnp.float32)
    bp  = 0.05 * jax.random.normal(ks[7], (1, IN_DIM), dtype=jnp.float32)
    g2  = 1.0 + 0.1 * jax.random.normal(ks[8], (1, IN_DIM), dtype=jnp.float32)
    bt2 = 0.1 * jax.random.normal(ks[9], (1, IN_DIM), dtype=jnp.float32)
    w1  = 0.05 * jax.random.normal(ks[10], (IN_DIM, HID), dtype=jnp.float32)
    bm1 = 0.05 * jax.random.normal(ks[11], (1, HID), dtype=jnp.float32)
    w2  = 0.05 * jax.random.normal(ks[12], (HID, IN_DIM), dtype=jnp.float32)
    bm2 = 0.05 * jax.random.normal(ks[13], (1, IN_DIM), dtype=jnp.float32)

    out = token_transformer(x, g1, bt1, wq, wk, wv, wp, bp, g2, bt2, w1, bm1, w2, bm2)
    out = jax.block_until_ready(out)

    ref = reference(x, g1, bt1, wq, wk, wv, wp, bp, g2, bt2, w1, bm1, w2, bm2)
    assert out.shape == (B, N, IN_DIM)
    # Tolerance loosened slightly vs 1e-4 because the softmax denominator uses the
    # approximate EUP reciprocal; observed error stays well below 2e-3.
    max_err = float(jnp.max(jnp.abs(out - ref)))
    assert jnp.allclose(out, ref, atol=2e-3, rtol=2e-3), f"mismatch vs reference, max abs err={max_err}"

    print("KERNEL_OK")
</pallas_src>

<mosaic_0001>
module attributes {stable_mosaic.version = 11 : i64} {
  func.func @token_transformer_kernel(%arg0: i32, %arg1: memref<2x16x64xf32, #tpu.memory_space<vmem>>, %arg2: memref<1x64xf32, #tpu.memory_space<vmem>>, %arg3: memref<1x64xf32, #tpu.memory_space<vmem>>, %arg4: memref<64x128xf32, #tpu.memory_space<vmem>>, %arg5: memref<64x128xf32, #tpu.memory_space<vmem>>, %arg6: memref<64x128xf32, #tpu.memory_space<vmem>>, %arg7: memref<128x128xf32, #tpu.memory_space<vmem>>, %arg8: memref<1x128xf32, #tpu.memory_space<vmem>>, %arg9: memref<1x128xf32, #tpu.memory_space<vmem>>, %arg10: memref<1x128xf32, #tpu.memory_space<vmem>>, %arg11: memref<128x128xf32, #tpu.memory_space<vmem>>, %arg12: memref<1x128xf32, #tpu.memory_space<vmem>>, %arg13: memref<128x128xf32, #tpu.memory_space<vmem>>, %arg14: memref<1x128xf32, #tpu.memory_space<vmem>>, %arg15: memref<2x16x128xf32, #tpu.memory_space<vmem>>) attributes {dimension_semantics = [#tpu.dimension_semantics<arbitrary>], iteration_bounds = array<i64: 1>, scalar_prefetch = 0 : i64, scratch_operands = 0 : i64, tpu.core_type = #tpu.core_type<tc>, window_params = [{pipeline_mode = #tpu.pipeline_mode<synchronous>, transform_indices = @transform_0, window_bounds = array<i64: 2, 16, 64>}, {pipeline_mode = #tpu.pipeline_mode<synchronous>, transform_indices = @transform_1, window_bounds = array<i64: 1, 64>}, {pipeline_mode = #tpu.pipeline_mode<synchronous>, transform_indices = @transform_2, window_bounds = array<i64: 1, 64>}, {pipeline_mode = #tpu.pipeline_mode<synchronous>, transform_indices = @transform_3, window_bounds = array<i64: 64, 128>}, {pipeline_mode = #tpu.pipeline_mode<synchronous>, transform_indices = @transform_4, window_bounds = array<i64: 64, 128>}, {pipeline_mode = #tpu.pipeline_mode<synchronous>, transform_indices = @transform_5, window_bounds = array<i64: 64, 128>}, {pipeline_mode = #tpu.pipeline_mode<synchronous>, transform_indices = @transform_6, window_bounds = array<i64: 128, 128>}, {pipeline_mode = #tpu.pipeline_mode<synchronous>, transform_indices = @transform_7, window_bounds = array<i64: 1, 128>}, {pipeline_mode = #tpu.pipeline_mode<synchronous>, transform_indices = @transform_8, window_bounds = array<i64: 1, 128>}, {pipeline_mode = #tpu.pipeline_mode<synchronous>, transform_indices = @transform_9, window_bounds = array<i64: 1, 128>}, {pipeline_mode = #tpu.pipeline_mode<synchronous>, transform_indices = @transform_10, window_bounds = array<i64: 128, 128>}, {pipeline_mode = #tpu.pipeline_mode<synchronous>, transform_indices = @transform_11, window_bounds = array<i64: 1, 128>}, {pipeline_mode = #tpu.pipeline_mode<synchronous>, transform_indices = @transform_12, window_bounds = array<i64: 128, 128>}, {pipeline_mode = #tpu.pipeline_mode<synchronous>, transform_indices = @transform_13, window_bounds = array<i64: 1, 128>}, {pipeline_mode = #tpu.pipeline_mode<synchronous>, transform_indices = @transform_14, window_bounds = array<i64: 2, 16, 128>}]} {
    %c0 = arith.constant 0 : index
    %c0_0 = arith.constant 0 : index
    %c0_1 = arith.constant 0 : index
    %0 = vector.load %arg1[%c0, %c0_0, %c0_1] : memref<2x16x64xf32, #tpu.memory_space<vmem>>, vector<2x16x64xf32>
    %1 = vector.shape_cast %0 : vector<2x16x64xf32> to vector<32x64xf32>
    %c0_2 = arith.constant 0 : index
    %c0_3 = arith.constant 0 : index
    %2 = vector.load %arg2[%c0_2, %c0_3] : memref<1x64xf32, #tpu.memory_space<vmem>>, vector<1x64xf32>
    %c0_4 = arith.constant 0 : index
    %c0_5 = arith.constant 0 : index
    %3 = vector.load %arg3[%c0_4, %c0_5] : memref<1x64xf32, #tpu.memory_space<vmem>>, vector<1x64xf32>
    %cst = arith.constant dense<0.000000e+00> : vector<32xf32>
    %4 = vector.multi_reduction <add>, %1, %cst [1] : vector<32x64xf32> to vector<32xf32>
    %5 = vector.shape_cast %4 : vector<32xf32> to vector<32x1xf32>
    %cst_6 = arith.constant 6.400000e+01 : f32
    %6 = vector.broadcast %cst_6 : f32 to vector<32x1xf32>
    %7 = arith.divf %5, %6 : vector<32x1xf32>
    %8 = vector.broadcast %7 : vector<32x1xf32> to vector<32x64xf32>
    %9 = arith.subf %1, %8 : vector<32x64xf32>
    %10 = arith.mulf %9, %9 : vector<32x64xf32>
    %cst_7 = arith.constant dense<0.000000e+00> : vector<32xf32>
    %11 = vector.multi_reduction <add>, %10, %cst_7 [1] : vector<32x64xf32> to vector<32xf32>
    %12 = vector.shape_cast %11 : vector<32xf32> to vector<32x1xf32>
    %cst_8 = arith.constant 6.400000e+01 : f32
    %13 = vector.broadcast %cst_8 : f32 to vector<32x1xf32>
    %14 = arith.divf %12, %13 : vector<32x1xf32>
    %cst_9 = arith.constant 9.99999974E-6 : f32
    %15 = vector.broadcast %cst_9 : f32 to vector<32x1xf32>
    %16 = arith.addf %14, %15 : vector<32x1xf32>
    %17 = math.rsqrt %16 : vector<32x1xf32>
    %18 = vector.broadcast %17 : vector<32x1xf32> to vector<32x64xf32>
    %19 = arith.mulf %9, %18 : vector<32x64xf32>
    %20 = vector.broadcast %2 : vector<1x64xf32> to vector<32x64xf32>
    %21 = arith.mulf %19, %20 : vector<32x64xf32>
    %22 = vector.broadcast %3 : vector<1x64xf32> to vector<32x64xf32>
    %23 = arith.addf %21, %22 : vector<32x64xf32>
    %c0_10 = arith.constant 0 : index
    %c0_11 = arith.constant 0 : index
    %24 = vector.load %arg4[%c0_10, %c0_11] : memref<64x128xf32, #tpu.memory_space<vmem>>, vector<64x128xf32>
    %cst_12 = arith.constant dense<0.000000e+00> : vector<32x128xf32>
    %25 = tpu.matmul %23, %24, %cst_12 {dimension_numbers = #tpu.dot_dimension_numbers<[1], [0], [0], [1], [0, 0, 1, 1], [], []>} : vector<32x64xf32>, vector<64x128xf32>, vector<32x128xf32> -> vector<32x128xf32>
    %c0_13 = arith.constant 0 : index
    %c0_14 = arith.constant 0 : index
    %26 = vector.load %arg5[%c0_13, %c0_14] : memref<64x128xf32, #tpu.memory_space<vmem>>, vector<64x128xf32>
    %cst_15 = arith.constant dense<0.000000e+00> : vector<32x128xf32>
    %27 = tpu.matmul %23, %26, %cst_15 {dimension_numbers = #tpu.dot_dimension_numbers<[1], [0], [0], [1], [0, 0, 1, 1], [], []>} : vector<32x64xf32>, vector<64x128xf32>, vector<32x128xf32> -> vector<32x128xf32>
    %c0_16 = arith.constant 0 : index
    %c0_17 = arith.constant 0 : index
    %28 = vector.load %arg6[%c0_16, %c0_17] : memref<64x128xf32, #tpu.memory_space<vmem>>, vector<64x128xf32>
    %cst_18 = arith.constant dense<0.000000e+00> : vector<32x128xf32>
    %29 = tpu.matmul %23, %28, %cst_18 {dimension_numbers = #tpu.dot_dimension_numbers<[1], [0], [0], [1], [0, 0, 1, 1], [], []>} : vector<32x64xf32>, vector<64x128xf32>, vector<32x128xf32> -> vector<32x128xf32>
    %30 = vector.shape_cast %25 : vector<32x128xf32> to vector<2x16x128xf32>
    %31 = vector.shape_cast %27 : vector<32x128xf32> to vector<2x16x128xf32>
    %32 = vector.shape_cast %29 : vector<32x128xf32> to vector<2x16x128xf32>
    "tpu.trace_start"() <{level = 10 : i32, message = "bnd,bmd->bnm"}> : () -> ()
    %cst_19 = arith.constant dense<0.000000e+00> : vector<2x16x16xf32>
    %33 = tpu.matmul %30, %31, %cst_19 {dimension_numbers = #tpu.dot_dimension_numbers<[2], [2], [1], [1], [0, 0, 0, 1, 1, 1], [0], [0]>} : vector<2x16x128xf32>, vector<2x16x128xf32>, vector<2x16x16xf32> -> vector<2x16x16xf32>
    "tpu.trace_stop"() : () -> ()
    %cst_20 = arith.constant 1.250000e-01 : f32
    %34 = vector.broadcast %cst_20 : f32 to vector<2x16x16xf32>
    %35 = arith.mulf %33, %34 : vector<2x16x16xf32>
    %cst_21 = arith.constant dense<0xFF800000> : vector<2x16xf32>
    %36 = vector.multi_reduction <maximumf>, %35, %cst_21 [2] : vector<2x16x16xf32> to vector<2x16xf32>
    %37 = vector.shape_cast %36 : vector<2x16xf32> to vector<2x16x1xf32>
    %38 = vector.broadcast %37 : vector<2x16x1xf32> to vector<2x16x16xf32>
    %39 = arith.subf %35, %38 : vector<2x16x16xf32>
    %40 = math.exp %39 : vector<2x16x16xf32>
    %cst_22 = arith.constant dense<0.000000e+00> : vector<2x16xf32>
    %41 = vector.multi_reduction <add>, %40, %cst_22 [2] : vector<2x16x16xf32> to vector<2x16xf32>
    %42 = vector.shape_cast %41 : vector<2x16xf32> to vector<2x16x1xf32>
    %43 = tpu.reciprocal %42 {approx = true} : vector<2x16x1xf32> -> vector<2x16x1xf32>
    %44 = vector.broadcast %43 : vector<2x16x1xf32> to vector<2x16x16xf32>
    %45 = arith.mulf %40, %44 : vector<2x16x16xf32>
    "tpu.trace_start"() <{level = 10 : i32, message = "bnm,bmd->bnd"}> : () -> ()
    %cst_23 = arith.constant dense<0.000000e+00> : vector<2x16x128xf32>
    %46 = tpu.matmul %45, %32, %cst_23 {dimension_numbers = #tpu.dot_dimension_numbers<[2], [1], [1], [2], [0, 0, 0, 1, 1, 2], [0], [0]>} : vector<2x16x16xf32>, vector<2x16x128xf32>, vector<2x16x128xf32> -> vector<2x16x128xf32>
    "tpu.trace_stop"() : () -> ()
    %47 = vector.shape_cast %46 : vector<2x16x128xf32> to vector<32x128xf32>
    %c0_24 = arith.constant 0 : index
    %c0_25 = arith.constant 0 : index
    %48 = vector.load %arg7[%c0_24, %c0_25] : memref<128x128xf32, #tpu.memory_space<vmem>>, vector<128x128xf32>
    %cst_26 = arith.constant dense<0.000000e+00> : vector<32x128xf32>
    %49 = tpu.matmul %47, %48, %cst_26 {dimension_numbers = #tpu.dot_dimension_numbers<[1], [0], [0], [1], [0, 0, 1, 1], [], []>} : vector<32x128xf32>, vector<128x128xf32>, vector<32x128xf32> -> vector<32x128xf32>
    %c0_27 = arith.constant 0 : index
    %c0_28 = arith.constant 0 : index
    %50 = vector.load %arg8[%c0_27, %c0_28] : memref<1x128xf32, #tpu.memory_space<vmem>>, vector<1x128xf32>
    %51 = vector.broadcast %50 : vector<1x128xf32> to vector<32x128xf32>
    %52 = arith.addf %49, %51 : vector<32x128xf32>
    %53 = arith.addf %29, %52 : vector<32x128xf32>
    %c0_29 = arith.constant 0 : index
    %c0_30 = arith.constant 0 : index
    %54 = vector.load %arg9[%c0_29, %c0_30] : memref<1x128xf32, #tpu.memory_space<vmem>>, vector<1x128xf32>
    %c0_31 = arith.constant 0 : index
    %c0_32 = arith.constant 0 : index
    %55 = vector.load %arg10[%c0_31, %c0_32] : memref<1x128xf32, #tpu.memory_space<vmem>>, vector<1x128xf32>
    %cst_33 = arith.constant dense<0.000000e+00> : vector<32xf32>
    %56 = vector.multi_reduction <add>, %53, %cst_33 [1] : vector<32x128xf32> to vector<32xf32>
    %57 = vector.shape_cast %56 : vector<32xf32> to vector<32x1xf32>
    %cst_34 = arith.constant 1.280000e+02 : f32
    %58 = vector.broadcast %cst_34 : f32 to vector<32x1xf32>
    %59 = arith.divf %57, %58 : vector<32x1xf32>
    %60 = vector.broadcast %59 : vector<32x1xf32> to vector<32x128xf32>
    %61 = arith.subf %53, %60 : vector<32x128xf32>
    %62 = arith.mulf %61, %61 : vector<32x128xf32>
    %cst_35 = arith.constant dense<0.000000e+00> : vector<32xf32>
    %63 = vector.multi_reduction <add>, %62, %cst_35 [1] : vector<32x128xf32> to vector<32xf32>
    %64 = vector.shape_cast %63 : vector<32xf32> to vector<32x1xf32>
    %cst_36 = arith.constant 1.280000e+02 : f32
    %65 = vector.broadcast %cst_36 : f32 to vector<32x1xf32>
    %66 = arith.divf %64, %65 : vector<32x1xf32>
    %cst_37 = arith.constant 9.99999974E-6 : f32
    %67 = vector.broadcast %cst_37 : f32 to vector<32x1xf32>
    %68 = arith.addf %66, %67 : vector<32x1xf32>
    %69 = math.rsqrt %68 : vector<32x1xf32>
    %70 = vector.broadcast %69 : vector<32x1xf32> to vector<32x128xf32>
    %71 = arith.mulf %61, %70 : vector<32x128xf32>
    %72 = vector.broadcast %54 : vector<1x128xf32> to vector<32x128xf32>
    %73 = arith.mulf %71, %72 : vector<32x128xf32>
    %74 = vector.broadcast %55 : vector<1x128xf32> to vector<32x128xf32>
    %75 = arith.addf %73, %74 : vector<32x128xf32>
    %c0_38 = arith.constant 0 : index
    %c0_39 = arith.constant 0 : index
    %76 = vector.load %arg11[%c0_38, %c0_39] : memref<128x128xf32, #tpu.memory_space<vmem>>, vector<128x128xf32>
    %cst_40 = arith.constant dense<0.000000e+00> : vector<32x128xf32>
    %77 = tpu.matmul %75, %76, %cst_40 {dimension_numbers = #tpu.dot_dimension_numbers<[1], [0], [0], [1], [0, 0, 1, 1], [], []>} : vector<32x128xf32>, vector<128x128xf32>, vector<32x128xf32> -> vector<32x128xf32>
    %c0_41 = arith.constant 0 : index
    %c0_42 = arith.constant 0 : index
    %78 = vector.load %arg12[%c0_41, %c0_42] : memref<1x128xf32, #tpu.memory_space<vmem>>, vector<1x128xf32>
    %79 = vector.broadcast %78 : vector<1x128xf32> to vector<32x128xf32>
    %80 = arith.addf %77, %79 : vector<32x128xf32>
    %cst_43 = arith.constant 5.000000e-01 : f32
    %81 = vector.broadcast %cst_43 : f32 to vector<32x128xf32>
    %82 = arith.mulf %81, %80 : vector<32x128xf32>
    %cst_44 = arith.constant 0.707106769 : f32
    %83 = vector.broadcast %cst_44 : f32 to vector<32x128xf32>
    %84 = arith.mulf %80, %83 : vector<32x128xf32>
    %85 = math.absf %84 : vector<32x128xf32>
    %cst_45 = arith.constant 0.327591091 : f32
    %86 = vector.broadcast %cst_45 : f32 to vector<32x128xf32>
    %87 = arith.mulf %86, %85 : vector<32x128xf32>
    %cst_46 = arith.constant 1.000000e+00 : f32
    %88 = vector.broadcast %cst_46 : f32 to vector<32x128xf32>
    %89 = arith.addf %88, %87 : vector<32x128xf32>
    %cst_47 = arith.constant 1.000000e+00 : f32
    %90 = vector.broadcast %cst_47 : f32 to vector<32x128xf32>
    %91 = arith.divf %90, %89 : vector<32x128xf32>
    %cst_48 = arith.constant 1.06140542 : f32
    %92 = vector.broadcast %cst_48 : f32 to vector<32x128xf32>
    %93 = arith.mulf %92, %91 : vector<32x128xf32>
    %cst_49 = arith.constant -1.45315206 : f32
    %94 = vector.broadcast %cst_49 : f32 to vector<32x128xf32>
    %95 = arith.addf %93, %94 : vector<32x128xf32>
    %96 = arith.mulf %95, %91 : vector<32x128xf32>
    %cst_50 = arith.constant 1.42141378 : f32
    %97 = vector.broadcast %cst_50 : f32 to vector<32x128xf32>
    %98 = arith.addf %96, %97 : vector<32x128xf32>
    %99 = arith.mulf %98, %91 : vector<32x128xf32>
    %cst_51 = arith.constant -0.284496725 : f32
    %100 = vector.broadcast %cst_51 : f32 to vector<32x128xf32>
    %101 = arith.addf %99, %100 : vector<32x128xf32>
    %102 = arith.mulf %101, %91 : vector<32x128xf32>
    %cst_52 = arith.constant 0.254829586 : f32
    %103 = vector.broadcast %cst_52 : f32 to vector<32x128xf32>
    %104 = arith.addf %102, %103 : vector<32x128xf32>
    %105 = arith.mulf %104, %91 : vector<32x128xf32>
    %cst_53 = arith.constant 0.000000e+00 : f32
    %106 = vector.broadcast %cst_53 : f32 to vector<32x128xf32>
    %107 = arith.subf %106, %85 : vector<32x128xf32>
    %108 = arith.mulf %107, %85 : vector<32x128xf32>
    %109 = math.exp %108 : vector<32x128xf32>
    %110 = arith.mulf %105, %109 : vector<32x128xf32>
    %cst_54 = arith.constant 1.000000e+00 : f32
    %111 = vector.broadcast %cst_54 : f32 to vector<32x128xf32>
    %112 = arith.subf %111, %110 : vector<32x128xf32>
    %cst_55 = arith.constant 0.000000e+00 : f32
    %113 = vector.broadcast %cst_55 : f32 to vector<32x128xf32>
    %114 = arith.cmpf olt, %84, %113 : vector<32x128xf32>
    %cst_56 = arith.constant 0.000000e+00 : f32
    %115 = vector.broadcast %cst_56 : f32 to vector<32x128xf32>
    %116 = arith.subf %115, %112 : vector<32x128xf32>
    %117 = arith.select %114, %116, %112 : vector<32x128xi1>, vector<32x128xf32>
    %cst_57 = arith.constant 1.000000e+00 : f32
    %118 = vector.broadcast %cst_57 : f32 to vector<32x128xf32>
    %119 = arith.addf %118, %117 : vector<32x128xf32>
    %120 = arith.mulf %82, %119 : vector<32x128xf32>
    %c0_58 = arith.constant 0 : index
    %c0_59 = arith.constant 0 : index
    %121 = vector.load %arg13[%c0_58, %c0_59] : memref<128x128xf32, #tpu.memory_space<vmem>>, vector<128x128xf32>
    %cst_60 = arith.constant dense<0.000000e+00> : vector<32x128xf32>
    %122 = tpu.matmul %120, %121, %cst_60 {dimension_numbers = #tpu.dot_dimension_numbers<[1], [0], [0], [1], [0, 0, 1, 1], [], []>} : vector<32x128xf32>, vector<128x128xf32>, vector<32x128xf32> -> vector<32x128xf32>
    %c0_61 = arith.constant 0 : index
    %c0_62 = arith.constant 0 : index
    %123 = vector.load %arg14[%c0_61, %c0_62] : memref<1x128xf32, #tpu.memory_space<vmem>>, vector<1x128xf32>
    %124 = vector.broadcast %123 : vector<1x128xf32> to vector<32x128xf32>
    %125 = arith.addf %122, %124 : vector<32x128xf32>
    %126 = arith.addf %53, %125 : vector<32x128xf32>
    %127 = vector.shape_cast %126 : vector<32x128xf32> to vector<2x16x128xf32>
    %c0_63 = arith.constant 0 : index
    %c0_64 = arith.constant 0 : index
    %c0_65 = arith.constant 0 : index
    %128 = vector.load %arg15[%c0_63, %c0_64, %c0_65] : memref<2x16x128xf32, #tpu.memory_space<vmem>>, vector<2x16x128xf32>
    tpu.vector_store %arg15[%c0_63, %c0_64, %c0_65], %127 {strides = array<i32>} : memref<2x16x128xf32, #tpu.memory_space<vmem>>, vector<2x16x128xf32>,
    return
  }
  func.func @transform_0(%arg0: i32) -> (i32, i32, i32) {
    %c0_i32 = arith.constant 0 : i32
    %c0_i32_0 = arith.constant 0 : i32
    %c0_i32_1 = arith.constant 0 : i32
    %c0_i32_2 = arith.constant 0 : i32
    return %c0_i32, %c0_i32_0, %c0_i32_1 : i32, i32, i32
  }
  func.func @transform_1(%arg0: i32) -> (i32, i32) {
    %c0_i32 = arith.constant 0 : i32
    %c0_i32_0 = arith.constant 0 : i32
    %c0_i32_1 = arith.constant 0 : i32
    return %c0_i32, %c0_i32_0 : i32, i32
  }
  func.func @transform_2(%arg0: i32) -> (i32, i32) {
    %c0_i32 = arith.constant 0 : i32
    %c0_i32_0 = arith.constant 0 : i32
    %c0_i32_1 = arith.constant 0 : i32
    return %c0_i32, %c0_i32_0 : i32, i32
  }
  func.func @transform_3(%arg0: i32) -> (i32, i32) {
    %c0_i32 = arith.constant 0 : i32
    %c0_i32_0 = arith.constant 0 : i32
    %c0_i32_1 = arith.constant 0 : i32
    return %c0_i32, %c0_i32_0 : i32, i32
  }
  func.func @transform_4(%arg0: i32) -> (i32, i32) {
    %c0_i32 = arith.constant 0 : i32
    %c0_i32_0 = arith.constant 0 : i32
    %c0_i32_1 = arith.constant 0 : i32
    return %c0_i32, %c0_i32_0 : i32, i32
  }
  func.func @transform_5(%arg0: i32) -> (i32, i32) {
    %c0_i32 = arith.constant 0 : i32
    %c0_i32_0 = arith.constant 0 : i32
    %c0_i32_1 = arith.constant 0 : i32
    return %c0_i32, %c0_i32_0 : i32, i32
  }
  func.func @transform_6(%arg0: i32) -> (i32, i32) {
    %c0_i32 = arith.constant 0 : i32
    %c0_i32_0 = arith.constant 0 : i32
    %c0_i32_1 = arith.constant 0 : i32
    return %c0_i32, %c0_i32_0 : i32, i32
  }
  func.func @transform_7(%arg0: i32) -> (i32, i32) {
    %c0_i32 = arith.constant 0 : i32
    %c0_i32_0 = arith.constant 0 : i32
    %c0_i32_1 = arith.constant 0 : i32
    return %c0_i32, %c0_i32_0 : i32, i32
  }
  func.func @transform_8(%arg0: i32) -> (i32, i32) {
    %c0_i32 = arith.constant 0 : i32
    %c0_i32_0 = arith.constant 0 : i32
    %c0_i32_1 = arith.constant 0 : i32
    return %c0_i32, %c0_i32_0 : i32, i32
  }
  func.func @transform_9(%arg0: i32) -> (i32, i32) {
    %c0_i32 = arith.constant 0 : i32
    %c0_i32_0 = arith.constant 0 : i32
    %c0_i32_1 = arith.constant 0 : i32
    return %c0_i32, %c0_i32_0 : i32, i32
  }
  func.func @transform_10(%arg0: i32) -> (i32, i32) {
    %c0_i32 = arith.constant 0 : i32
    %c0_i32_0 = arith.constant 0 : i32
    %c0_i32_1 = arith.constant 0 : i32
    return %c0_i32, %c0_i32_0 : i32, i32
  }
  func.func @transform_11(%arg0: i32) -> (i32, i32) {
    %c0_i32 = arith.constant 0 : i32
    %c0_i32_0 = arith.constant 0 : i32
    %c0_i32_1 = arith.constant 0 : i32
    return %c0_i32, %c0_i32_0 : i32, i32
  }
  func.func @transform_12(%arg0: i32) -> (i32, i32) {
    %c0_i32 = arith.constant 0 : i32
    %c0_i32_0 = arith.constant 0 : i32
    %c0_i32_1 = arith.constant 0 : i32
    return %c0_i32, %c0_i32_0 : i32, i32
  }
  func.func @transform_13(%arg0: i32) -> (i32, i32) {
    %c0_i32 = arith.constant 0 : i32
    %c0_i32_0 = arith.constant 0 : i32
    %c0_i32_1 = arith.constant 0 : i32
    return %c0_i32, %c0_i32_0 : i32, i32
  }
  func.func @transform_14(%arg0: i32) -> (i32, i32, i32) {
    %c0_i32 = arith.constant 0 : i32
    %c0_i32_0 = arith.constant 0 : i32
    %c0_i32_1 = arith.constant 0 : i32
    %c0_i32_2 = arith.constant 0 : i32
    return %c0_i32, %c0_i32_0, %c0_i32_1 : i32, i32, i32
  }
}

</mosaic_0001>

<llo_original>
// kernel: tpu_custom_call.1
$region0: #{tpu_custom_call.1}
  #allocation0 [shape = 'u32[]', space=smem, size = 0x4, offset = 0x4, fixed_abs, tag = 'smem constant byte address 0x4 - core index']
  #allocation1 [shape = 'u32[144,128]{1,0:T(1,128)}', space=vmem, size = 0x12000, scoped, tag = 'internal scratch']
  %s0 = inlined_call_operand.hbm [shape: f32[2,16,64], index: 0, kind: input, shape index: {}]
  %s1 = inlined_call_operand.vmem [shape: f32[1,64], index: 1, kind: input, shape index: {}]
  %s2 = inlined_call_operand.vmem [shape: f32[1,64], index: 2, kind: input, shape index: {}]
  %s3 = inlined_call_operand.hbm [shape: f32[64,128], index: 3, kind: input, shape index: {}]
  %s4 = inlined_call_operand.hbm [shape: f32[64,128], index: 4, kind: input, shape index: {}]
  %s5 = inlined_call_operand.hbm [shape: f32[64,128], index: 5, kind: input, shape index: {}]
  %s6 = inlined_call_operand.hbm [shape: f32[128,128], index: 6, kind: input, shape index: {}]
  %s7 = inlined_call_operand.vmem [shape: f32[1,128], index: 7, kind: input, shape index: {}]
  %s8 = inlined_call_operand.vmem [shape: f32[1,128], index: 8, kind: input, shape index: {}]
  %s9 = inlined_call_operand.vmem [shape: f32[1,128], index: 9, kind: input, shape index: {}]
  %s10 = inlined_call_operand.hbm [shape: f32[128,128], index: 10, kind: input, shape index: {}]
  %s11 = inlined_call_operand.vmem [shape: f32[1,128], index: 11, kind: input, shape index: {}]
  %s12 = inlined_call_operand.hbm [shape: f32[128,128], index: 12, kind: input, shape index: {}]
  %s13 = inlined_call_operand.vmem [shape: f32[1,128], index: 13, kind: input, shape index: {}]
  %s14 = inlined_call_operand.hbm [shape: f32[2,16,128], index: 14, kind: output, shape index: {}]
  %s15 = sld [smem:[#allocation0]]
  $region94: #{tpu_custom_call.1} parent=0
    _
  %s17 = ssub.s32 1, %s15
  %s18 = scalar_select 0, %s17, %s15
  $region1: #{tpu_custom_call.1} parent=0
    #allocation2 [shape = 'u8[16384]{0}', space=vmem, size = 0x4000, scoped, tag = 'input window, operand 0, single buffered']
    #allocation3 [shape = 's32[1]{0}', space=sflag, size = 0x4, scoped, tag = 'scoped memory for tpu_custom_call.1']
    #allocation4 [shape = 's32[1]{0}', space=sflag, size = 0x4, scoped, tag = 'scoped memory for tpu_custom_call.1']
    #allocation5 [shape = 'u8[32768]{0}', space=vmem, size = 0x8000, scoped, tag = 'input window, operand 3, single buffered']
    #allocation6 [shape = 's32[1]{0}', space=sflag, size = 0x4, scoped, tag = 'scoped memory for tpu_custom_call.1']
    #allocation7 [shape = 'u8[32768]{0}', space=vmem, size = 0x8000, scoped, tag = 'input window, operand 4, single buffered']
    #allocation8 [shape = 'u8[32768]{0}', space=vmem, size = 0x8000, scoped, tag = 'input window, operand 5, single buffered']
    #allocation9 [shape = 's32[1]{0}', space=sflag, size = 0x4, scoped, tag = 'scoped memory for tpu_custom_call.1']
    #allocation10 [shape = 'u8[65536]{0}', space=vmem, size = 0x10000, scoped, tag = 'input window, operand 6, single buffered']
    #allocation11 [shape = 'u8[65536]{0}', space=vmem, size = 0x10000, scoped, tag = 'input window, operand 10, single buffered']
    #allocation12 [shape = 's32[1]{0}', space=sflag, size = 0x4, scoped, tag = 'scoped memory for tpu_custom_call.1']
    #allocation13 [shape = 'u8[65536]{0}', space=vmem, size = 0x10000, scoped, tag = 'input window, operand 12, single buffered']
    #allocation14 [shape = 'u8[16384]{0}', space=vmem, size = 0x4000, scoped, tag = 'output window, operand 0, single buffered']
    %19 = vsyncpa [#allocation3], 0
    %20 = vsyncpa [#allocation6], 0
    %21 = vsyncpa [#allocation9], 0
    %22 = vsyncpa [#allocation12], 0
    %23 = vsyncpa [#allocation4], 0
    // Predicated region
    $region2: #{tpu_custom_call.1} parent=1 // pred_check
      _
    $region3: #{tpu_custom_call.1} parent=1 // pred_check_branch
      %25 = sbr.rel (0) target = $region5
    $region4: #{tpu_custom_call.1} parent=1 // pred_region
      %s27 = ssub.s32 512, 512
      %28 = vsyncadd [#allocation3], %s27
      %s29 = sshll.u32 [#allocation2], 4
      %s30 = int_to_ptr.vmem [resolvable:$true] %s29
      %35 = dma.hbm_to_vmem [thread:$0]  %s0, 512, %s30, [#allocation3], 128, 128, 8
    $region5: #{tpu_custom_call.1} parent=1 // pred_fallthru
      _
    // Predicated region
    $region6: #{tpu_custom_call.1} parent=1 // pred_check
      _
    $region7: #{tpu_custom_call.1} parent=1 // pred_check_branch
      %37 = sbr.rel (0) target = $region9
    $region8: #{tpu_custom_call.1} parent=1 // pred_region
      _
    $region9: #{tpu_custom_call.1} parent=1 // pred_fallthru
      _
    // Predicated region
    $region10: #{tpu_custom_call.1} parent=1 // pred_check
      _
    $region11: #{tpu_custom_call.1} parent=1 // pred_check_branch
      %39 = sbr.rel (0) target = $region13
    $region12: #{tpu_custom_call.1} parent=1 // pred_region
      _
    $region13: #{tpu_custom_call.1} parent=1 // pred_fallthru
      _
    // Predicated region
    $region14: #{tpu_custom_call.1} parent=1 // pred_check
      _
    $region15: #{tpu_custom_call.1} parent=1 // pred_check_branch
      %41 = sbr.rel (0) target = $region17
    $region16: #{tpu_custom_call.1} parent=1 // pred_region
      %s43 = ssub.s32 1024, 1024
      %44 = vsyncadd [#allocation6], %s43
      %s45 = sshll.u32 [#allocation5], 4
      %s46 = int_to_ptr.vmem [resolvable:$true] %s45
      %51 = dma.hbm_to_vmem [thread:$0]  %s3, 1024, %s46, [#allocation6], 128, 128, 8
    $region17: #{tpu_custom_call.1} parent=1 // pred_fallthru
      _
    // Predicated region
    $region18: #{tpu_custom_call.1} parent=1 // pred_check
      _
    $region19: #{tpu_custom_call.1} parent=1 // pred_check_branch
      %53 = sbr.rel (0) target = $region21
    $region20: #{tpu_custom_call.1} parent=1 // pred_region
      %s55 = ssub.s32 1024, 1024
      %56 = vsyncadd [#allocation6], %s55
      %s57 = sshll.u32 [#allocation7], 4
      %s58 = int_to_ptr.vmem [resolvable:$true] %s57
      %63 = dma.hbm_to_vmem [thread:$0]  %s4, 1024, %s58, [#allocation6], 128, 128, 8
    $region21: #{tpu_custom_call.1} parent=1 // pred_fallthru
      _
    // Predicated region
    $region22: #{tpu_custom_call.1} parent=1 // pred_check
      _
    $region23: #{tpu_custom_call.1} parent=1 // pred_check_branch
      %65 = sbr.rel (0) target = $region25
    $region24: #{tpu_custom_call.1} parent=1 // pred_region
      %s67 = ssub.s32 1024, 1024
      %68 = vsyncadd [#allocation9], %s67
      %s69 = sshll.u32 [#allocation8], 4
      %s70 = int_to_ptr.vmem [resolvable:$true] %s69
      %75 = dma.hbm_to_vmem [thread:$0]  %s5, 1024, %s70, [#allocation9], 128, 128, 8
    $region25: #{tpu_custom_call.1} parent=1 // pred_fallthru
      _
    // Predicated region
    $region26: #{tpu_custom_call.1} parent=1 // pred_check
      _
    $region27: #{tpu_custom_call.1} parent=1 // pred_check_branch
      %77 = sbr.rel (0) target = $region29
    $region28: #{tpu_custom_call.1} parent=1 // pred_region
      %s79 = ssub.s32 2048, 2048
      %80 = vsyncadd [#allocation9], %s79
      %s81 = sshll.u32 [#allocation10], 4
      %s82 = int_to_ptr.vmem [resolvable:$true] %s81
      %87 = dma.hbm_to_vmem [thread:$0]  %s6, 2048, %s82, [#allocation9], 128, 128, 8
    $region29: #{tpu_custom_call.1} parent=1 // pred_fallthru
      _
    // Predicated region
    $region30: #{tpu_custom_call.1} parent=1 // pred_check
      _
    $region31: #{tpu_custom_call.1} parent=1 // pred_check_branch
      %89 = sbr.rel (0) target = $region33
    $region32: #{tpu_custom_call.1} parent=1 // pred_region
      _
    $region33: #{tpu_custom_call.1} parent=1 // pred_fallthru
      _
    // Predicated region
    $region34: #{tpu_custom_call.1} parent=1 // pred_check
      _
    $region35: #{tpu_custom_call.1} parent=1 // pred_check_branch
      %91 = sbr.rel (0) target = $region37
    $region36: #{tpu_custom_call.1} parent=1 // pred_region
      _
    $region37: #{tpu_custom_call.1} parent=1 // pred_fallthru
      _
    // Predicated region
    $region38: #{tpu_custom_call.1} parent=1 // pred_check
      _
    $region39: #{tpu_custom_call.1} parent=1 // pred_check_branch
      %93 = sbr.rel (0) target = $region41
    $region40: #{tpu_custom_call.1} parent=1 // pred_region
      _
    $region41: #{tpu_custom_call.1} parent=1 // pred_fallthru
      _
    // Predicated region
    $region42: #{tpu_custom_call.1} parent=1 // pred_check
      _
    $region43: #{tpu_custom_call.1} parent=1 // pred_check_branch
      %95 = sbr.rel (0) target = $region45
    $region44: #{tpu_custom_call.1} parent=1 // pred_region
      %s97 = ssub.s32 2048, 2048
      %98 = vsyncadd [#allocation12], %s97
      %s99 = sshll.u32 [#allocation11], 4
      %s100 = int_to_ptr.vmem [resolvable:$true] %s99
      %105 = dma.hbm_to_vmem [thread:$0]  %s10, 2048, %s100, [#allocation12], 128, 128, 8
    $region45: #{tpu_custom_call.1} parent=1 // pred_fallthru
      _
    // Predicated region
    $region46: #{tpu_custom_call.1} parent=1 // pred_check
      _
    $region47: #{tpu_custom_call.1} parent=1 // pred_check_branch
      %107 = sbr.rel (0) target = $region49
    $region48: #{tpu_custom_call.1} parent=1 // pred_region
      _
    $region49: #{tpu_custom_call.1} parent=1 // pred_fallthru
      _
    // Predicated region
    $region50: #{tpu_custom_call.1} parent=1 // pred_check
      _
    $region51: #{tpu_custom_call.1} parent=1 // pred_check_branch
      %109 = sbr.rel (0) target = $region53
    $region52: #{tpu_custom_call.1} parent=1 // pred_region
      %s111 = ssub.s32 2048, 2048
      %112 = vsyncadd [#allocation12], %s111
      %s113 = sshll.u32 [#allocation13], 4
      %s114 = int_to_ptr.vmem [resolvable:$true] %s113
      %119 = dma.hbm_to_vmem [thread:$0]  %s12, 2048, %s114, [#allocation12], 128, 128, 8
    $region53: #{tpu_custom_call.1} parent=1 // pred_fallthru
      _
    // Predicated region
    $region54: #{tpu_custom_call.1} parent=1 // pred_check
      _
    $region55: #{tpu_custom_call.1} parent=1 // pred_check_branch
      %121 = sbr.rel (0) target = $region57
    $region56: #{tpu_custom_call.1} parent=1 // pred_region
      _
    $region57: #{tpu_custom_call.1} parent=1 // pred_fallthru
      _
    // Predicated region
    $region58: #{tpu_custom_call.1} parent=1 // pred_check
      _
    $region59: #{tpu_custom_call.1} parent=1 // pred_check_branch
      %123 = sbr.rel (0) target = $region61
    $region60: #{tpu_custom_call.1} parent=1 // pred_region
      %124 = dma.done [#allocation3], 512
    $region61: #{tpu_custom_call.1} parent=1 // pred_fallthru
      _
    // Predicated region
    $region62: #{tpu_custom_call.1} parent=1 // pred_check
      _
    $region63: #{tpu_custom_call.1} parent=1 // pred_check_branch
      %126 = sbr.rel (0) target = $region65
    $region64: #{tpu_custom_call.1} parent=1 // pred_region
      %127 = dma.done [#allocation6], 1024
    $region65: #{tpu_custom_call.1} parent=1 // pred_fallthru
      _
    // Predicated region
    $region66: #{tpu_custom_call.1} parent=1 // pred_check
      _
    $region67: #{tpu_custom_call.1} parent=1 // pred_check_branch
      %129 = sbr.rel (0) target = $region69
    $region68: #{tpu_custom_call.1} parent=1 // pred_region
      %130 = dma.done [#allocation6], 1024
    $region69: #{tpu_custom_call.1} parent=1 // pred_fallthru
      _
    // Predicated region
    $region70: #{tpu_custom_call.1} parent=1 // pred_check
      _
    $region71: #{tpu_custom_call.1} parent=1 // pred_check_branch
      %132 = sbr.rel (0) target = $region73
    $region72: #{tpu_custom_call.1} parent=1 // pred_region
      %133 = dma.done [#allocation9], 1024
    $region73: #{tpu_custom_call.1} parent=1 // pred_fallthru
      _
    // Predicated region
    $region74: #{tpu_custom_call.1} parent=1 // pred_check
      _
    $region75: #{tpu_custom_call.1} parent=1 // pred_check_branch
      %135 = sbr.rel (0) target = $region77
    $region76: #{tpu_custom_call.1} parent=1 // pred_region
      %136 = dma.done [#allocation9], 2048
    $region77: #{tpu_custom_call.1} parent=1 // pred_fallthru
      _
    // Predicated region
    $region78: #{tpu_custom_call.1} parent=1 // pred_check
      _
    $region79: #{tpu_custom_call.1} parent=1 // pred_check_branch
      %138 = sbr.rel (0) target = $region81
    $region80: #{tpu_custom_call.1} parent=1 // pred_region
      %139 = dma.done [#allocation12], 2048
    $region81: #{tpu_custom_call.1} parent=1 // pred_fallthru
      _
    // Predicated region
    $region82: #{tpu_custom_call.1} parent=1 // pred_check
      _
    $region83: #{tpu_custom_call.1} parent=1 // pred_check_branch
      %141 = sbr.rel (0) target = $region85
    $region84: #{tpu_custom_call.1} parent=1 // pred_region
      %142 = dma.done [#allocation12], 2048
    $region85: #{tpu_custom_call.1} parent=1 // pred_fallthru
      _
    %v143 = vld [vmem:[#allocation2] sm:$0xff]
    %v144 = vld [vmem:[#allocation2 + $0x8] sm:$0xff]
    %v145 = vld [vmem:[#allocation2 + $0x10] sm:$0xff]
    %v146 = vld [vmem:[#allocation2 + $0x18] sm:$0xff]
    %v147 = vld [vmem:[%s1] sm:$0x1]
    %v148 = vld [vmem:[%s2] sm:$0x1]
    %vm149 = vcmask 523264
    %v150 = vsel %vm149, %v143, 0.0
    %151 = vadd.xlane.f32.xlu0 %v150
    %v152 = vpop.xlane.xlu0 %151
    %v153 = vsel %vm149, %v144, 0.0
    %154 = vadd.xlane.f32.xlu0 %v153
    %v155 = vpop.xlane.xlu0 %154
    %v156 = vsel %vm149, %v145, 0.0
    %157 = vadd.xlane.f32.xlu0 %v156
    %v158 = vpop.xlane.xlu0 %157
    %v159 = vsel %vm149, %v146, 0.0
    %160 = vadd.xlane.f32.xlu0 %v159
    %v161 = vpop.xlane.xlu0 %160
    %v162 = vrcp.pop 64.0
    %v163 = vmul.f32 %v152, %v162
    %v164 = vmul.f32 %v155, %v162
    %v165 = vmul.f32 %v158, %v162
    %v166 = vmul.f32 %v161, %v162
    %v167 = vsub.f32 %v143, %v163
    %v168 = vsub.f32 %v144, %v164
    %v169 = vsub.f32 %v145, %v165
    %v170 = vsub.f32 %v146, %v166
    %v171 = vmul.f32 %v167, %v167
    %v172 = vmul.f32 %v168, %v168
    %v173 = vmul.f32 %v169, %v169
    %v174 = vmul.f32 %v170, %v170
    %v175 = vsel %vm149, %v171, 0.0
    %176 = vadd.xlane.f32.xlu0 %v175
    %v177 = vpop.xlane.xlu0 %176
    %v178 = vsel %vm149, %v172, 0.0
    %179 = vadd.xlane.f32.xlu0 %v178
    %v180 = vpop.xlane.xlu0 %179
    %v181 = vsel %vm149, %v173, 0.0
    %182 = vadd.xlane.f32.xlu0 %v181
    %v183 = vpop.xlane.xlu0 %182
    %v184 = vsel %vm149, %v174, 0.0
    %185 = vadd.xlane.f32.xlu0 %v184
    %v186 = vpop.xlane.xlu0 %185
    %v187 = vmul.f32 %v177, %v162
    %v188 = vmul.f32 %v180, %v162
    %v189 = vmul.f32 %v183, %v162
    %v190 = vmul.f32 %v186, %v162
    %v191 = vadd.f32 %v187, 1e-05
    %v192 = vadd.f32 %v188, 1e-05
    %v193 = vadd.f32 %v189, 1e-05
    %v194 = vadd.f32 %v190, 1e-05
    %v195 = vrsqrt.pop %v191
    %v196 = vrsqrt.pop %v192
    %v197 = vrsqrt.pop %v193
    %v198 = vrsqrt.pop %v194
    %v199 = vmul.f32 %v167, %v195
    %v200 = vmul.f32 %v168, %v196
    %v201 = vmul.f32 %v169, %v197
    %v202 = vmul.f32 %v170, %v198
    %v204 = vlaneseq
    %v205 = vshrl.u32 %v204, 7
    %v206 = vsub.s32 0, %v205
    %v207 = vrot.slane %v147, %v206
    %v209 = vmul.f32 %v199, %v207
    %v210 = vmul.f32 %v200, %v207
    %v211 = vmul.f32 %v201, %v207
    %v212 = vmul.f32 %v202, %v207
    %v214 = vlaneseq
    %v215 = vshrl.u32 %v214, 7
    %v216 = vsub.s32 0, %v215
    %v217 = vrot.slane %v148, %v216
    %v219 = vadd.f32 %v209, %v217
    %v220 = vadd.f32 %v210, %v217
    %v221 = vadd.f32 %v211, %v217
    %v222 = vadd.f32 %v212, %v217
    %v223 = vld [vmem:[#allocation5] sm:$0xff]
    %v224 = vld [vmem:[#allocation5 + $0x8] sm:$0xff]
    %v225 = vld [vmem:[#allocation5 + $0x10] sm:$0xff]
    %v226 = vld [vmem:[#allocation5 + $0x18] sm:$0xff]
    %v227 = vld [vmem:[#allocation5 + $0x20] sm:$0xff]
    %v228 = vld [vmem:[#allocation5 + $0x28] sm:$0xff]
    %v229 = vld [vmem:[#allocation5 + $0x30] sm:$0xff]
    %v230 = vld [vmem:[#allocation5 + $0x38] sm:$0xff]
    %v232 = vsel %vm149, %v219, 0
    %v235 = vsel %vm149, %v220, 0
    %v238 = vsel %vm149, %v221, 0
    %v241 = vsel %vm149, %v222, 0
    %243 = vmatprep.subr.mxu0 0.0
    %244 = vmatpush1.msra.mxu0 %v223
    %245 = vmatprep.subr.mxu0 0.0
    %246 = vmatpush1.msra.mxu0 %v224
    %247 = vmatprep.subr.mxu0 0.0
    %248 = vmatpush1.msra.mxu0 %v225
    %249 = vmatprep.subr.mxu0 0.0
    %250 = vmatpush1.msra.mxu0 %v226
    %251 = vmatprep.subr.mxu0 0.0
    %252 = vmatpush1.msra.mxu0 %v227
    %253 = vmatprep.subr.mxu0 0.0
    %254 = vmatpush1.msra.mxu0 %v228
    %255 = vmatprep.subr.mxu0 0.0
    %256 = vmatpush1.msra.mxu0 %v229
    %257 = vmatprep.subr.mxu0 0.0
    %258 = vmatpush1.msra.mxu0 %v230
    %259 = vmatprep.subr.mxu0 0.0
    %260 = vmatpush1.msra.mxu0 0.0
    %261 = vmatprep.subr.mxu0 0.0
    %262 = vmatpush1.msra.mxu0 0.0
    %263 = vmatprep.subr.mxu0 0.0
    %264 = vmatpush1.msra.mxu0 0.0
    %265 = vmatprep.subr.mxu0 0.0
    %266 = vmatpush1.msra.mxu0 0.0
    %267 = vmatprep.subr.mxu0 0.0
    %268 = vmatpush1.msra.mxu0 0.0
    %269 = vmatprep.subr.mxu0 0.0
    %270 = vmatpush1.msra.mxu0 0.0
    %271 = vmatprep.subr.mxu0 0.0
    %272 = vmatpush1.msra.mxu0 0.0
    %273 = vmatprep.subr.mxu0 0.0
    %274 = vmatpush1.msra.mxu0 0.0
    %275 = vmatprep.subr.mxu0 0.0
    %276 = vmatpush1.msra.mxu0 0.0
    %277 = vmatprep.subr.mxu0 0.0
    %278 = vmatpush1.msra.mxu0 0.0
    %279 = vmatprep.subr.mxu0 0.0
    %280 = vmatpush1.msra.mxu0 0.0
    %281 = vmatprep.subr.mxu0 0.0
    %282 = vmatpush1.msra.mxu0 0.0
    %283 = vmatprep.subr.mxu0 0.0
    %284 = vmatpush1.msra.mxu0 0.0
    %285 = vmatprep.subr.mxu0 0.0
    %286 = vmatpush1.msra.mxu0 0.0
    %287 = vmatprep.subr.mxu0 0.0
    %288 = vmatpush1.msra.mxu0 0.0
    %289 = vmatprep.subr.mxu0 0.0
    %290 = vmatpush1.msra.mxu0 0.0
    %291 = vmatprep.subr.mxu0 0.0
    %292 = vmatpush1.msra.mxu0 0.0
    %293 = vmatprep.subr.mxu0 0.0
    %294 = vmatpush1.msra.mxu0 0.0
    %295 = vmatprep.subr.mxu0 0.0
    %296 = vmatpush1.msra.mxu0 0.0
    %297 = vmatprep.subr.mxu0 0.0
    %298 = vmatpush1.msra.mxu0 0.0
    %299 = vmatprep.subr.mxu0 0.0
    %300 = vmatpush1.msra.mxu0 0.0
    %301 = vmatprep.subr.mxu0 0.0
    %302 = vmatpush1.msra.mxu0 0.0
    %303 = vmatprep.subr.mxu0 0.0
    %304 = vmatpush1.msra.mxu0 0.0
    %305 = vmatprep.subr.mxu0 0.0
    %306 = vmatpush1.msra.mxu0 0.0
    %307 = vmatprep.mubr.f32.mxu0 0.0
    %308 = vmatmul.mubr.f32.gmra.mrb[0].mxu0 %v232
    %v309 = vpop.f32.mrb[0].mxu0
    %v310 = vadd.f32 0.0, %v309
    %v311 = vpop.f32.mrb[0].mxu0
    %312 = vmatprep.mubr.f32.mxu0 0.0
    %313 = vmatmul.mubr.f32.gmra.mrb[0].mxu0 %v235
    %v314 = vpop.f32.mrb[0].mxu0
    %v315 = vadd.f32 0.0, %v314
    %v316 = vpop.f32.mrb[0].mxu0
    %317 = vmatprep.mubr.f32.mxu0 0.0
    %318 = vmatmul.mubr.f32.gmra.mrb[0].mxu0 %v238
    %v319 = vpop.f32.mrb[0].mxu0
    %v320 = vadd.f32 0.0, %v319
    %v321 = vpop.f32.mrb[0].mxu0
    %322 = vmatprep.mubr.f32.mxu0 0.0
    %323 = vmatmul.mubr.f32.gmra.mrb[0].mxu0 %v241
    %v324 = vpop.f32.mrb[0].mxu0
    %v325 = vadd.f32 0.0, %v324
    %v326 = vpop.f32.mrb[0].mxu0
    %327 = vdwg.mxu0
    %v328 = vld [vmem:[#allocation7] sm:$0xff]
    %v329 = vld [vmem:[#allocation7 + $0x8] sm:$0xff]
    %v330 = vld [vmem:[#allocation7 + $0x10] sm:$0xff]
    %v331 = vld [vmem:[#allocation7 + $0x18] sm:$0xff]
    %v332 = vld [vmem:[#allocation7 + $0x20] sm:$0xff]
    %v333 = vld [vmem:[#allocation7 + $0x28] sm:$0xff]
    %v334 = vld [vmem:[#allocation7 + $0x30] sm:$0xff]
    %v335 = vld [vmem:[#allocation7 + $0x38] sm:$0xff]
    %336 = vmatprep.subr.mxu0 0.0
    %337 = vmatpush1.msra.mxu0 %v328
    %338 = vmatprep.subr.mxu0 0.0
    %339 = vmatpush1.msra.mxu0 %v329
    %340 = vmatprep.subr.mxu0 0.0
    %341 = vmatpush1.msra.mxu0 %v330
    %342 = vmatprep.subr.mxu0 0.0
    %343 = vmatpush1.msra.mxu0 %v331
    %344 = vmatprep.subr.mxu0 0.0
    %345 = vmatpush1.msra.mxu0 %v332
    %346 = vmatprep.subr.mxu0 0.0
    %347 = vmatpush1.msra.mxu0 %v333
    %348 = vmatprep.subr.mxu0 0.0
    %349 = vmatpush1.msra.mxu0 %v334
    %350 = vmatprep.subr.mxu0 0.0
    %351 = vmatpush1.msra.mxu0 %v335
    %352 = vmatprep.subr.mxu0 0.0
    %353 = vmatpush1.msra.mxu0 0.0
    %354 = vmatprep.subr.mxu0 0.0
    %355 = vmatpush1.msra.mxu0 0.0
    %356 = vmatprep.subr.mxu0 0.0
    %357 = vmatpush1.msra.mxu0 0.0
    %358 = vmatprep.subr.mxu0 0.0
    %359 = vmatpush1.msra.mxu0 0.0
    %360 = vmatprep.subr.mxu0 0.0
    %361 = vmatpush1.msra.mxu0 0.0
    %362 = vmatprep.subr.mxu0 0.0
    %363 = vmatpush1.msra.mxu0 0.0
    %364 = vmatprep.subr.mxu0 0.0
    %365 = vmatpush1.msra.mxu0 0.0
    %366 = vmatprep.subr.mxu0 0.0
    %367 = vmatpush1.msra.mxu0 0.0
    %368 = vmatprep.subr.mxu0 0.0
    %369 = vmatpush1.msra.mxu0 0.0
    %370 = vmatprep.subr.mxu0 0.0
    %371 = vmatpush1.msra.mxu0 0.0
    %372 = vmatprep.subr.mxu0 0.0
    %373 = vmatpush1.msra.mxu0 0.0
    %374 = vmatprep.subr.mxu0 0.0
    %375 = vmatpush1.msra.mxu0 0.0
    %376 = vmatprep.subr.mxu0 0.0
    %377 = vmatpush1.msra.mxu0 0.0
    %378 = vmatprep.subr.mxu0 0.0
    %379 = vmatpush1.msra.mxu0 0.0
    %380 = vmatprep.subr.mxu0 0.0
    %381 = vmatpush1.msra.mxu0 0.0
    %382 = vmatprep.subr.mxu0 0.0
    %383 = vmatpush1.msra.mxu0 0.0
    %384 = vmatprep.subr.mxu0 0.0
    %385 = vmatpush1.msra.mxu0 0.0
    %386 = vmatprep.subr.mxu0 0.0
    %387 = vmatpush1.msra.mxu0 0.0
    %388 = vmatprep.subr.mxu0 0.0
    %389 = vmatpush1.msra.mxu0 0.0
    %390 = vmatprep.subr.mxu0 0.0
    %391 = vmatpush1.msra.mxu0 0.0
    %392 = vmatprep.subr.mxu0 0.0
    %393 = vmatpush1.msra.mxu0 0.0
    %394 = vmatprep.subr.mxu0 0.0
    %395 = vmatpush1.msra.mxu0 0.0
    %396 = vmatprep.subr.mxu0 0.0
    %397 = vmatpush1.msra.mxu0 0.0
    %398 = vmatprep.subr.mxu0 0.0
    %399 = vmatpush1.msra.mxu0 0.0
    %400 = vmatprep.mubr.f32.mxu0 0.0
    %401 = vmatmul.mubr.f32.gmra.mrb[0].mxu0 %v232
    %v402 = vpop.f32.mrb[0].mxu0
    %v403 = vadd.f32 0.0, %v402
    %v404 = vpop.f32.mrb[0].mxu0
    %405 = vmatprep.mubr.f32.mxu0 0.0
    %406 = vmatmul.mubr.f32.gmra.mrb[0].mxu0 %v235
    %v407 = vpop.f32.mrb[0].mxu0
    %v408 = vadd.f32 0.0, %v407
    %v409 = vpop.f32.mrb[0].mxu0
    %410 = vmatprep.mubr.f32.mxu0 0.0
    %411 = vmatmul.mubr.f32.gmra.mrb[0].mxu0 %v238
    %v412 = vpop.f32.mrb[0].mxu0
    %v413 = vadd.f32 0.0, %v412
    %v414 = vpop.f32.mrb[0].mxu0
    %415 = vmatprep.mubr.f32.mxu0 0.0
    %416 = vmatmul.mubr.f32.gmra.mrb[0].mxu0 %v241
    %v417 = vpop.f32.mrb[0].mxu0
    %v418 = vadd.f32 0.0, %v417
    %v419 = vpop.f32.mrb[0].mxu0
    %420 = vdwg.mxu0
    %v421 = vld [vmem:[#allocation8] sm:$0xff]
    %v422 = vld [vmem:[#allocation8 + $0x8] sm:$0xff]
    %v423 = vld [vmem:[#allocation8 + $0x10] sm:$0xff]
    %v424 = vld [vmem:[#allocation8 + $0x18] sm:$0xff]
    %v425 = vld [vmem:[#allocation8 + $0x20] sm:$0xff]
    %v426 = vld [vmem:[#allocation8 + $0x28] sm:$0xff]
    %v427 = vld [vmem:[#allocation8 + $0x30] sm:$0xff]
    %v428 = vld [vmem:[#allocation8 + $0x38] sm:$0xff]
    %429 = vmatprep.subr.mxu0 0.0
    %430 = vmatpush1.msra.mxu0 %v421
    %431 = vmatprep.subr.mxu0 0.0
    %432 = vmatpush1.msra.mxu0 %v422
    %433 = vmatprep.subr.mxu0 0.0
    %434 = vmatpush1.msra.mxu0 %v423
    %435 = vmatprep.subr.mxu0 0.0
    %436 = vmatpush1.msra.mxu0 %v424
    %437 = vmatprep.subr.mxu0 0.0
    %438 = vmatpush1.msra.mxu0 %v425
    %439 = vmatprep.subr.mxu0 0.0
    %440 = vmatpush1.msra.mxu0 %v426
    %441 = vmatprep.subr.mxu0 0.0
    %442 = vmatpush1.msra.mxu0 %v427
    %443 = vmatprep.subr.mxu0 0.0
    %444 = vmatpush1.msra.mxu0 %v428
    %445 = vmatprep.subr.mxu0 0.0
    %446 = vmatpush1.msra.mxu0 0.0
    %447 = vmatprep.subr.mxu0 0.0
    %448 = vmatpush1.msra.mxu0 0.0
    %449 = vmatprep.subr.mxu0 0.0
    %450 = vmatpush1.msra.mxu0 0.0
    %451 = vmatprep.subr.mxu0 0.0
    %452 = vmatpush1.msra.mxu0 0.0
    %453 = vmatprep.subr.mxu0 0.0
    %454 = vmatpush1.msra.mxu0 0.0
    %455 = vmatprep.subr.mxu0 0.0
    %456 = vmatpush1.msra.mxu0 0.0
    %457 = vmatprep.subr.mxu0 0.0
    %458 = vmatpush1.msra.mxu0 0.0
    %459 = vmatprep.subr.mxu0 0.0
    %460 = vmatpush1.msra.mxu0 0.0
    %461 = vmatprep.subr.mxu0 0.0
    %462 = vmatpush1.msra.mxu0 0.0
    %463 = vmatprep.subr.mxu0 0.0
    %464 = vmatpush1.msra.mxu0 0.0
    %465 = vmatprep.subr.mxu0 0.0
    %466 = vmatpush1.msra.mxu0 0.0
    %467 = vmatprep.subr.mxu0 0.0
    %468 = vmatpush1.msra.mxu0 0.0
    %469 = vmatprep.subr.mxu0 0.0
    %470 = vmatpush1.msra.mxu0 0.0
    %471 = vmatprep.subr.mxu0 0.0
    %472 = vmatpush1.msra.mxu0 0.0
    %473 = vmatprep.subr.mxu0 0.0
    %474 = vmatpush1.msra.mxu0 0.0
    %475 = vmatprep.subr.mxu0 0.0
    %476 = vmatpush1.msra.mxu0 0.0
    %477 = vmatprep.subr.mxu0 0.0
    %478 = vmatpush1.msra.mxu0 0.0
    %479 = vmatprep.subr.mxu0 0.0
    %480 = vmatpush1.msra.mxu0 0.0
    %481 = vmatprep.subr.mxu0 0.0
    %482 = vmatpush1.msra.mxu0 0.0
    %483 = vmatprep.subr.mxu0 0.0
    %484 = vmatpush1.msra.mxu0 0.0
    %485 = vmatprep.subr.mxu0 0.0
    %486 = vmatpush1.msra.mxu0 0.0
    %487 = vmatprep.subr.mxu0 0.0
    %488 = vmatpush1.msra.mxu0 0.0
    %489 = vmatprep.subr.mxu0 0.0
    %490 = vmatpush1.msra.mxu0 0.0
    %491 = vmatprep.subr.mxu0 0.0
    %492 = vmatpush1.msra.mxu0 0.0
    %493 = vmatprep.mubr.f32.mxu0 0.0
    %494 = vmatmul.mubr.f32.gmra.mrb[0].mxu0 %v232
    %v495 = vpop.f32.mrb[0].mxu0
    %v496 = vadd.f32 0.0, %v495
    %v497 = vpop.f32.mrb[0].mxu0
    %498 = vmatprep.mubr.f32.mxu0 0.0
    %499 = vmatmul.mubr.f32.gmra.mrb[0].mxu0 %v235
    %v500 = vpop.f32.mrb[0].mxu0
    %v501 = vadd.f32 0.0, %v500
    %v502 = vpop.f32.mrb[0].mxu0
    %503 = vmatprep.mubr.f32.mxu0 0.0
    %504 = vmatmul.mubr.f32.gmra.mrb[0].mxu0 %v238
    %v505 = vpop.f32.mrb[0].mxu0
    %v506 = vadd.f32 0.0, %v505
    %v507 = vpop.f32.mrb[0].mxu0
    %508 = vmatprep.mubr.f32.mxu0 0.0
    %509 = vmatmul.mubr.f32.gmra.mrb[0].mxu0 %v241
    %v510 = vpop.f32.mrb[0].mxu0
    %v511 = vadd.f32 0.0, %v510
    %v512 = vpop.f32.mrb[0].mxu0
    %513 = vdwg.mxu0
    %514 = vmatprep.subr.mxu0 0.0
    %515 = vmatpush1.xpose.msra.mxu0 %v403
    %516 = vmatprep.subr.mxu0 0.0
    %517 = vmatpush1.xpose.msra.mxu0 %v408
    %518 = vmatprep.subr.mxu0 0.0
    %519 = vmatpush1.xpose.msra.mxu0 0.0
    %520 = vmatprep.subr.mxu0 0.0
    %521 = vmatpush1.xpose.msra.mxu0 0.0
    %522 = vmatprep.subr.mxu0 0.0
    %523 = vmatpush1.xpose.msra.mxu0 0.0
    %524 = vmatprep.subr.mxu0 0.0
    %525 = vmatpush1.xpose.msra.mxu0 0.0
    %526 = vmatprep.subr.mxu0 0.0
    %527 = vmatpush1.xpose.msra.mxu0 0.0
    %528 = vmatprep.subr.mxu0 0.0
    %529 = vmatpush1.xpose.msra.mxu0 0.0
    %530 = vmatprep.subr.mxu0 0.0
    %531 = vmatpush1.xpose.msra.mxu0 0.0
    %532 = vmatprep.subr.mxu0 0.0
    %533 = vmatpush1.xpose.msra.mxu0 0.0
    %534 = vmatprep.subr.mxu0 0.0
    %535 = vmatpush1.xpose.msra.mxu0 0.0
    %536 = vmatprep.subr.mxu0 0.0
    %537 = vmatpush1.xpose.msra.mxu0 0.0
    %538 = vmatprep.subr.mxu0 0.0
    %539 = vmatpush1.xpose.msra.mxu0 0.0
    %540 = vmatprep.subr.mxu0 0.0
    %541 = vmatpush1.xpose.msra.mxu0 0.0
    %542 = vmatprep.subr.mxu0 0.0
    %543 = vmatpush1.xpose.msra.mxu0 0.0
    %544 = vmatprep.subr.mxu0 0.0
    %545 = vmatpush1.xpose.msra.mxu0 0.0
    %546 = vmatprep.subr.mxu0 0.0
    %547 = vmatpush1.xpose.msra.mxu0 0.0
    %548 = vmatprep.subr.mxu0 0.0
    %549 = vmatpush1.xpose.msra.mxu0 0.0
    %550 = vmatprep.subr.mxu0 0.0
    %551 = vmatpush1.xpose.msra.mxu0 0.0
    %552 = vmatprep.subr.mxu0 0.0
    %553 = vmatpush1.xpose.msra.mxu0 0.0
    %554 = vmatprep.subr.mxu0 0.0
    %555 = vmatpush1.xpose.msra.mxu0 0.0
    %556 = vmatprep.subr.mxu0 0.0
    %557 = vmatpush1.xpose.msra.mxu0 0.0
    %558 = vmatprep.subr.mxu0 0.0
    %559 = vmatpush1.xpose.msra.mxu0 0.0
    %560 = vmatprep.subr.mxu0 0.0
    %561 = vmatpush1.xpose.msra.mxu0 0.0
    %562 = vmatprep.subr.mxu0 0.0
    %563 = vmatpush1.xpose.msra.mxu0 0.0
    %564 = vmatprep.subr.mxu0 0.0
    %565 = vmatpush1.xpose.msra.mxu0 0.0
    %566 = vmatprep.subr.mxu0 0.0
    %567 = vmatpush1.xpose.msra.mxu0 0.0
    %568 = vmatprep.subr.mxu0 0.0
    %569 = vmatpush1.xpose.msra.mxu0 0.0
    %570 = vmatprep.subr.mxu0 0.0
    %571 = vmatpush1.xpose.msra.mxu0 0.0
    %572 = vmatprep.subr.mxu0 0.0
    %573 = vmatpush1.xpose.msra.mxu0 0.0
    %574 = vmatprep.subr.mxu0 0.0
    %575 = vmatpush1.xpose.msra.mxu0 0.0
    %576 = vmatprep.subr.mxu0 0.0
    %577 = vmatpush1.xpose.msra.mxu0 0.0
    %578 = vmatprep.mubr.f32.mxu0 0.0
    %579 = vmatmul.mubr.f32.gmra.mrb[0].mxu0 %v310
    %v580 = vpop.f32.mrb[0].mxu0
    %v581 = vadd.f32 0.0, %v580
    %v582 = vpop.f32.mrb[0].mxu0
    %583 = vmatprep.mubr.f32.mxu0 0.0
    %584 = vmatmul.mubr.f32.gmra.mrb[0].mxu0 %v315
    %v585 = vpop.f32.mrb[0].mxu0
    %v586 = vadd.f32 0.0, %v585
    %v587 = vpop.f32.mrb[0].mxu0
    %588 = vdwg.mxu0
    %589 = vmatprep.subr.mxu0 0.0
    %590 = vmatpush1.xpose.msra.mxu0 %v413
    %591 = vmatprep.subr.mxu0 0.0
    %592 = vmatpush1.xpose.msra.mxu0 %v418
    %593 = vmatprep.subr.mxu0 0.0
    %594 = vmatpush1.xpose.msra.mxu0 0.0
    %595 = vmatprep.subr.mxu0 0.0
    %596 = vmatpush1.xpose.msra.mxu0 0.0
    %597 = vmatprep.subr.mxu0 0.0
    %598 = vmatpush1.xpose.msra.mxu0 0.0
    %599 = vmatprep.subr.mxu0 0.0
    %600 = vmatpush1.xpose.msra.mxu0 0.0
    %601 = vmatprep.subr.mxu0 0.0
    %602 = vmatpush1.xpose.msra.mxu0 0.0
    %603 = vmatprep.subr.mxu0 0.0
    %604 = vmatpush1.xpose.msra.mxu0 0.0
    %605 = vmatprep.subr.mxu0 0.0
    %606 = vmatpush1.xpose.msra.mxu0 0.0
    %607 = vmatprep.subr.mxu0 0.0
    %608 = vmatpush1.xpose.msra.mxu0 0.0
    %609 = vmatprep.subr.mxu0 0.0
    %610 = vmatpush1.xpose.msra.mxu0 0.0
    %611 = vmatprep.subr.mxu0 0.0
    %612 = vmatpush1.xpose.msra.mxu0 0.0
    %613 = vmatprep.subr.mxu0 0.0
    %614 = vmatpush1.xpose.msra.mxu0 0.0
    %615 = vmatprep.subr.mxu0 0.0
    %616 = vmatpush1.xpose.msra.mxu0 0.0
    %617 = vmatprep.subr.mxu0 0.0
    %618 = vmatpush1.xpose.msra.mxu0 0.0
    %619 = vmatprep.subr.mxu0 0.0
    %620 = vmatpush1.xpose.msra.mxu0 0.0
    %621 = vmatprep.subr.mxu0 0.0
    %622 = vmatpush1.xpose.msra.mxu0 0.0
    %623 = vmatprep.subr.mxu0 0.0
    %624 = vmatpush1.xpose.msra.mxu0 0.0
    %625 = vmatprep.subr.mxu0 0.0
    %626 = vmatpush1.xpose.msra.mxu0 0.0
    %627 = vmatprep.subr.mxu0 0.0
    %628 = vmatpush1.xpose.msra.mxu0 0.0
    %629 = vmatprep.subr.mxu0 0.0
    %630 = vmatpush1.xpose.msra.mxu0 0.0
    %631 = vmatprep.subr.mxu0 0.0
    %632 = vmatpush1.xpose.msra.mxu0 0.0
    %633 = vmatprep.subr.mxu0 0.0
    %634 = vmatpush1.xpose.msra.mxu0 0.0
    %635 = vmatprep.subr.mxu0 0.0
    %636 = vmatpush1.xpose.msra.mxu0 0.0
    %637 = vmatprep.subr.mxu0 0.0
    %638 = vmatpush1.xpose.msra.mxu0 0.0
    %639 = vmatprep.subr.mxu0 0.0
    %640 = vmatpush1.xpose.msra.mxu0 0.0
    %641 = vmatprep.subr.mxu0 0.0
    %642 = vmatpush1.xpose.msra.mxu0 0.0
    %643 = vmatprep.subr.mxu0 0.0
    %644 = vmatpush1.xpose.msra.mxu0 0.0
    %645 = vmatprep.subr.mxu0 0.0
    %646 = vmatpush1.xpose.msra.mxu0 0.0
    %647 = vmatprep.subr.mxu0 0.0
    %648 = vmatpush1.xpose.msra.mxu0 0.0
    %649 = vmatprep.subr.mxu0 0.0
    %650 = vmatpush1.xpose.msra.mxu0 0.0
    %651 = vmatprep.subr.mxu0 0.0
    %652 = vmatpush1.xpose.msra.mxu0 0.0
    %653 = vmatprep.mubr.f32.mxu0 0.0
    %654 = vmatmul.mubr.f32.gmra.mrb[0].mxu0 %v320
    %v655 = vpop.f32.mrb[0].mxu0
    %v656 = vadd.f32 0.0, %v655
    %v657 = vpop.f32.mrb[0].mxu0
    %658 = vmatprep.mubr.f32.mxu0 0.0
    %659 = vmatmul.mubr.f32.gmra.mrb[0].mxu0 %v325
    %v660 = vpop.f32.mrb[0].mxu0
    %v661 = vadd.f32 0.0, %v660
    %v662 = vpop.f32.mrb[0].mxu0
    %663 = vdwg.mxu0
    %v664 = vmul.f32 %v581, 0.125
    %v665 = vmul.f32 %v586, 0.125
    %v666 = vmul.f32 %v656, 0.125
    %v667 = vmul.f32 %v661, 0.125
    %vm668 = vcmask 130048
    %v669 = vsel %vm668, %v664, -inf
    %670 = vmax.xlane.f32.xlu0 %v669
    %v671 = vpop.xlane.xlu0 %670
    %v672 = vsel %vm668, %v665, -inf
    %673 = vmax.xlane.f32.xlu0 %v672
    %v674 = vpop.xlane.xlu0 %673
    %v675 = vsel %vm668, %v666, -inf
    %676 = vmax.xlane.f32.xlu0 %v675
    %v677 = vpop.xlane.xlu0 %676
    %v678 = vsel %vm668, %v667, -inf
    %679 = vmax.xlane.f32.xlu0 %v678
    %v680 = vpop.xlane.xlu0 %679
    %v681 = vsub.f32 %v664, %v671
    %v682 = vsub.f32 %v665, %v674
    %v683 = vsub.f32 %v666, %v677
    %v684 = vsub.f32 %v667, %v680
    %v685 = vmul.f32 %v681, 1.442695
    %v686 = vpow.pop %v685
    %v687 = vmul.f32 %v682, 1.442695
    %v688 = vpow.pop %v687
    %v689 = vmul.f32 %v683, 1.442695
    %v690 = vpow.pop %v689
    %v691 = vmul.f32 %v684, 1.442695
    %v692 = vpow.pop %v691
    %v693 = vsel %vm668, %v686, 0.0
    %694 = vadd.xlane.f32.xlu0 %v693
    %v695 = vpop.xlane.xlu0 %694
    %v696 = vsel %vm668, %v688, 0.0
    %697 = vadd.xlane.f32.xlu0 %v696
    %v698 = vpop.xlane.xlu0 %697
    %v699 = vsel %vm668, %v690, 0.0
    %700 = vadd.xlane.f32.xlu0 %v699
    %v701 = vpop.xlane.xlu0 %700
    %v702 = vsel %vm668, %v692, 0.0
    %703 = vadd.xlane.f32.xlu0 %v702
    %v704 = vpop.xlane.xlu0 %703
    %v705 = vrcp.pop %v695
    %v706 = vrcp.pop %v698
    %v707 = vrcp.pop %v701
    %v708 = vrcp.pop %v704
    %v709 = vmul.f32 %v686, %v705
    %v710 = vmul.f32 %v688, %v706
    %v711 = vmul.f32 %v690, %v707
    %v712 = vmul.f32 %v692, %v708
    %v714 = vsel %vm668, %v709, 0
    %v717 = vsel %vm668, %v710, 0
    %719 = vmatprep.subr.mxu0 0.0
    %720 = vmatpush1.msra.mxu0 %v496
    %721 = vmatprep.subr.mxu0 0.0
    %722 = vmatpush1.msra.mxu0 %v501
    %723 = vmatprep.subr.mxu0 0.0
    %724 = vmatpush1.msra.mxu0 0.0
    %725 = vmatprep.subr.mxu0 0.0
    %726 = vmatpush1.msra.mxu0 0.0
    %727 = vmatprep.subr.mxu0 0.0
    %728 = vmatpush1.msra.mxu0 0.0
    %729 = vmatprep.subr.mxu0 0.0
    %730 = vmatpush1.msra.mxu0 0.0
    %731 = vmatprep.subr.mxu0 0.0
    %732 = vmatpush1.msra.mxu0 0.0
    %733 = vmatprep.subr.mxu0 0.0
    %734 = vmatpush1.msra.mxu0 0.0
    %735 = vmatprep.subr.mxu0 0.0
    %736 = vmatpush1.msra.mxu0 0.0
    %737 = vmatprep.subr.mxu0 0.0
    %738 = vmatpush1.msra.mxu0 0.0
    %739 = vmatprep.subr.mxu0 0.0
    %740 = vmatpush1.msra.mxu0 0.0
    %741 = vmatprep.subr.mxu0 0.0
    %742 = vmatpush1.msra.mxu0 0.0
    %743 = vmatprep.subr.mxu0 0.0
    %744 = vmatpush1.msra.mxu0 0.0
    %745 = vmatprep.subr.mxu0 0.0
    %746 = vmatpush1.msra.mxu0 0.0
    %747 = vmatprep.subr.mxu0 0.0
    %748 = vmatpush1.msra.mxu0 0.0
    %749 = vmatprep.subr.mxu0 0.0
    %750 = vmatpush1.msra.mxu0 0.0
    %751 = vmatprep.subr.mxu0 0.0
    %752 = vmatpush1.msra.mxu0 0.0
    %753 = vmatprep.subr.mxu0 0.0
    %754 = vmatpush1.msra.mxu0 0.0
    %755 = vmatprep.subr.mxu0 0.0
    %756 = vmatpush1.msra.mxu0 0.0
    %757 = vmatprep.subr.mxu0 0.0
    %758 = vmatpush1.msra.mxu0 0.0
    %759 = vmatprep.subr.mxu0 0.0
    %760 = vmatpush1.msra.mxu0 0.0
    %761 = vmatprep.subr.mxu0 0.0
    %762 = vmatpush1.msra.mxu0 0.0
    %763 = vmatprep.subr.mxu0 0.0
    %764 = vmatpush1.msra.mxu0 0.0
    %765 = vmatprep.subr.mxu0 0.0
    %766 = vmatpush1.msra.mxu0 0.0
    %767 = vmatprep.subr.mxu0 0.0
    %768 = vmatpush1.msra.mxu0 0.0
    %769 = vmatprep.subr.mxu0 0.0
    %770 = vmatpush1.msra.mxu0 0.0
    %771 = vmatprep.subr.mxu0 0.0
    %772 = vmatpush1.msra.mxu0 0.0
    %773 = vmatprep.subr.mxu0 0.0
    %774 = vmatpush1.msra.mxu0 0.0
    %775 = vmatprep.subr.mxu0 0.0
    %776 = vmatpush1.msra.mxu0 0.0
    %777 = vmatprep.subr.mxu0 0.0
    %778 = vmatpush1.msra.mxu0 0.0
    %779 = vmatprep.subr.mxu0 0.0
    %780 = vmatpush1.msra.mxu0 0.0
    %781 = vmatprep.subr.mxu0 0.0
    %782 = vmatpush1.msra.mxu0 0.0
    %783 = vmatprep.mubr.f32.mxu0 0.0
    %784 = vmatmul.mubr.f32.gmra.mrb[0].mxu0 %v714
    %v785 = vpop.f32.mrb[0].mxu0
    %v786 = vadd.f32 0.0, %v785
    %v787 = vpop.f32.mrb[0].mxu0
    %788 = vmatprep.mubr.f32.mxu0 0.0
    %789 = vmatmul.mubr.f32.gmra.mrb[0].mxu0 %v717
    %v790 = vpop.f32.mrb[0].mxu0
    %v791 = vadd.f32 0.0, %v790
    %v792 = vpop.f32.mrb[0].mxu0
    %793 = vdwg.mxu0
    %v795 = vsel %vm668, %v711, 0
    %v798 = vsel %vm668, %v712, 0
    %800 = vmatprep.subr.mxu0 0.0
    %801 = vmatpush1.msra.mxu0 %v506
    %802 = vmatprep.subr.mxu0 0.0
    %803 = vmatpush1.msra.mxu0 %v511
    %804 = vmatprep.subr.mxu0 0.0
    %805 = vmatpush1.msra.mxu0 0.0
    %806 = vmatprep.subr.mxu0 0.0
    %807 = vmatpush1.msra.mxu0 0.0
    %808 = vmatprep.subr.mxu0 0.0
    %809 = vmatpush1.msra.mxu0 0.0
    %810 = vmatprep.subr.mxu0 0.0
    %811 = vmatpush1.msra.mxu0 0.0
    %812 = vmatprep.subr.mxu0 0.0
    %813 = vmatpush1.msra.mxu0 0.0
    %814 = vmatprep.subr.mxu0 0.0
    %815 = vmatpush1.msra.mxu0 0.0
    %816 = vmatprep.subr.mxu0 0.0
    %817 = vmatpush1.msra.mxu0 0.0
    %818 = vmatprep.subr.mxu0 0.0
    %819 = vmatpush1.msra.mxu0 0.0
    %820 = vmatprep.subr.mxu0 0.0
    %821 = vmatpush1.msra.mxu0 0.0
    %822 = vmatprep.subr.mxu0 0.0
    %823 = vmatpush1.msra.mxu0 0.0
    %824 = vmatprep.subr.mxu0 0.0
    %825 = vmatpush1.msra.mxu0 0.0
    %826 = vmatprep.subr.mxu0 0.0
    %827 = vmatpush1.msra.mxu0 0.0
    %828 = vmatprep.subr.mxu0 0.0
    %829 = vmatpush1.msra.mxu0 0.0
    %830 = vmatprep.subr.mxu0 0.0
    %831 = vmatpush1.msra.mxu0 0.0
    %832 = vmatprep.subr.mxu0 0.0
    %833 = vmatpush1.msra.mxu0 0.0
    %834 = vmatprep.subr.mxu0 0.0
    %835 = vmatpush1.msra.mxu0 0.0
    %836 = vmatprep.subr.mxu0 0.0
    %837 = vmatpush1.msra.mxu0 0.0
    %838 = vmatprep.subr.mxu0 0.0
    %839 = vmatpush1.msra.mxu0 0.0
    %840 = vmatprep.subr.mxu0 0.0
    %841 = vmatpush1.msra.mxu0 0.0
    %842 = vmatprep.subr.mxu0 0.0
    %843 = vmatpush1.msra.mxu0 0.0
    %844 = vmatprep.subr.mxu0 0.0
    %845 = vmatpush1.msra.mxu0 0.0
    %846 = vmatprep.subr.mxu0 0.0
    %847 = vmatpush1.msra.mxu0 0.0
    %848 = vmatprep.subr.mxu0 0.0
    %849 = vmatpush1.msra.mxu0 0.0
    %850 = vmatprep.subr.mxu0 0.0
    %851 = vmatpush1.msra.mxu0 0.0
    %852 = vmatprep.subr.mxu0 0.0
    %853 = vmatpush1.msra.mxu0 0.0
    %854 = vmatprep.subr.mxu0 0.0
    %855 = vmatpush1.msra.mxu0 0.0
    %856 = vmatprep.subr.mxu0 0.0
    %857 = vmatpush1.msra.mxu0 0.0
    %858 = vmatprep.subr.mxu0 0.0
    %859 = vmatpush1.msra.mxu0 0.0
    %860 = vmatprep.subr.mxu0 0.0
    %861 = vmatpush1.msra.mxu0 0.0
    %862 = vmatprep.subr.mxu0 0.0
    %863 = vmatpush1.msra.mxu0 0.0
    %864 = vmatprep.mubr.f32.mxu0 0.0
    %865 = vmatmul.mubr.f32.gmra.mrb[0].mxu0 %v795
    %v866 = vpop.f32.mrb[0].mxu0
    %v867 = vadd.f32 0.0, %v866
    %v868 = vpop.f32.mrb[0].mxu0
    %869 = vmatprep.mubr.f32.mxu0 0.0
    %870 = vmatmul.mubr.f32.gmra.mrb[0].mxu0 %v798
    %v871 = vpop.f32.mrb[0].mxu0
    %v872 = vadd.f32 0.0, %v871
    %v873 = vpop.f32.mrb[0].mxu0
    %874 = vdwg.mxu0
    %v875 = vld [vmem:[#allocation10] sm:$0xff]
    %v876 = vld [vmem:[#allocation10 + $0x8] sm:$0xff]
    %v877 = vld [vmem:[#allocation10 + $0x10] sm:$0xff]
    %v878 = vld [vmem:[#allocation10 + $0x18] sm:$0xff]
    %v879 = vld [vmem:[#allocation10 + $0x20] sm:$0xff]
    %v880 = vld [vmem:[#allocation10 + $0x28] sm:$0xff]
    %v881 = vld [vmem:[#allocation10 + $0x30] sm:$0xff]
    %v882 = vld [vmem:[#allocation10 + $0x38] sm:$0xff]
    %v883 = vld [vmem:[#allocation10 + $0x40] sm:$0xff]
    %v884 = vld [vmem:[#allocation10 + $0x48] sm:$0xff]
    %v885 = vld [vmem:[#allocation10 + $0x50] sm:$0xff]
    %v886 = vld [vmem:[#allocation10 + $0x58] sm:$0xff]
    %v887 = vld [vmem:[#allocation10 + $0x60] sm:$0xff]
    %v888 = vld [vmem:[#allocation10 + $0x68] sm:$0xff]
    %v889 = vld [vmem:[#allocation10 + $0x70] sm:$0xff]
    %v890 = vld [vmem:[#allocation10 + $0x78] sm:$0xff]
    %v891 = vld [vmem:[%s7] sm:$0x1]
    %v893 = vlaneseq
    %v894 = vshrl.u32 %v893, 7
    %v895 = vsub.s32 0, %v894
    %v896 = vrot.slane %v891, %v895
    %898 = vmatprep.subr.mxu0 0.0
    %899 = vmatpush1.msra.mxu0 %v875
    %900 = vmatprep.subr.mxu0 0.0
    %901 = vmatpush1.msra.mxu0 %v876
    %902 = vmatprep.subr.mxu0 0.0
    %903 = vmatpush1.msra.mxu0 %v877
    %904 = vmatprep.subr.mxu0 0.0
    %905 = vmatpush1.msra.mxu0 %v878
    %906 = vmatprep.subr.mxu0 0.0
    %907 = vmatpush1.msra.mxu0 %v879
    %908 = vmatprep.subr.mxu0 0.0
    %909 = vmatpush1.msra.mxu0 %v880
    %910 = vmatprep.subr.mxu0 0.0
    %911 = vmatpush1.msra.mxu0 %v881
    %912 = vmatprep.subr.mxu0 0.0
    %913 = vmatpush1.msra.mxu0 %v882
    %914 = vmatprep.subr.mxu0 0.0
    %915 = vmatpush1.msra.mxu0 %v883
    %916 = vmatprep.subr.mxu0 0.0
    %917 = vmatpush1.msra.mxu0 %v884
    %918 = vmatprep.subr.mxu0 0.0
    %919 = vmatpush1.msra.mxu0 %v885
    %920 = vmatprep.subr.mxu0 0.0
    %921 = vmatpush1.msra.mxu0 %v886
    %922 = vmatprep.subr.mxu0 0.0
    %923 = vmatpush1.msra.mxu0 %v887
    %924 = vmatprep.subr.mxu0 0.0
    %925 = vmatpush1.msra.mxu0 %v888
    %926 = vmatprep.subr.mxu0 0.0
    %927 = vmatpush1.msra.mxu0 %v889
    %928 = vmatprep.subr.mxu0 0.0
    %929 = vmatpush1.msra.mxu0 %v890
    %930 = vmatprep.subr.mxu0 0.0
    %931 = vmatpush1.msra.mxu0 0.0
    %932 = vmatprep.subr.mxu0 0.0
    %933 = vmatpush1.msra.mxu0 0.0
    %934 = vmatprep.subr.mxu0 0.0
    %935 = vmatpush1.msra.mxu0 0.0
    %936 = vmatprep.subr.mxu0 0.0
    %937 = vmatpush1.msra.mxu0 0.0
    %938 = vmatprep.subr.mxu0 0.0
    %939 = vmatpush1.msra.mxu0 0.0
    %940 = vmatprep.subr.mxu0 0.0
    %941 = vmatpush1.msra.mxu0 0.0
    %942 = vmatprep.subr.mxu0 0.0
    %943 = vmatpush1.msra.mxu0 0.0
    %944 = vmatprep.subr.mxu0 0.0
    %945 = vmatpush1.msra.mxu0 0.0
    %946 = vmatprep.subr.mxu0 0.0
    %947 = vmatpush1.msra.mxu0 0.0
    %948 = vmatprep.subr.mxu0 0.0
    %949 = vmatpush1.msra.mxu0 0.0
    %950 = vmatprep.subr.mxu0 0.0
    %951 = vmatpush1.msra.mxu0 0.0
    %952 = vmatprep.subr.mxu0 0.0
    %953 = vmatpush1.msra.mxu0 0.0
    %954 = vmatprep.subr.mxu0 0.0
    %955 = vmatpush1.msra.mxu0 0.0
    %956 = vmatprep.subr.mxu0 0.0
    %957 = vmatpush1.msra.mxu0 0.0
    %958 = vmatprep.subr.mxu0 0.0
    %959 = vmatpush1.msra.mxu0 0.0
    %960 = vmatprep.subr.mxu0 0.0
    %961 = vmatpush1.msra.mxu0 0.0
    %962 = vmatprep.mubr.f32.mxu0 0.0
    %963 = vmatmul.mubr.f32.gmra.mrb[0].mxu0 %v786
    %v964 = vpop.f32.mrb[0].mxu0
    %v965 = vadd.f32 %v896, %v964
    %v966 = vpop.f32.mrb[0].mxu0
    %967 = vmatprep.mubr.f32.mxu0 0.0
    %968 = vmatmul.mubr.f32.gmra.mrb[0].mxu0 %v791
    %v969 = vpop.f32.mrb[0].mxu0
    %v970 = vadd.f32 %v896, %v969
    %v971 = vpop.f32.mrb[0].mxu0
    %972 = vmatprep.mubr.f32.mxu0 0.0
    %973 = vmatmul.mubr.f32.gmra.mrb[0].mxu0 %v867
    %v974 = vpop.f32.mrb[0].mxu0
    %v975 = vadd.f32 %v896, %v974
    %v976 = vpop.f32.mrb[0].mxu0
    %977 = vmatprep.mubr.f32.mxu0 0.0
    %978 = vmatmul.mubr.f32.gmra.mrb[0].mxu0 %v872
    %v979 = vpop.f32.mrb[0].mxu0
    %v980 = vadd.f32 %v896, %v979
    %v981 = vpop.f32.mrb[0].mxu0
    %982 = vdwg.mxu0
    %v983 = vadd.f32 %v496, %v965
    %v984 = vadd.f32 %v501, %v970
    %v985 = vadd.f32 %v506, %v975
    %v986 = vadd.f32 %v511, %v980
    %v987 = vld [vmem:[%s8] sm:$0x1]
    %v988 = vld [vmem:[%s9] sm:$0x1]
    %989 = vadd.xlane.f32.xlu0 %v983
    %v990 = vpop.xlane.xlu0 %989
    %991 = vadd.xlane.f32.xlu0 %v984
    %v992 = vpop.xlane.xlu0 %991
    %993 = vadd.xlane.f32.xlu0 %v985
    %v994 = vpop.xlane.xlu0 %993
    %995 = vadd.xlane.f32.xlu0 %v986
    %v996 = vpop.xlane.xlu0 %995
    %v997 = vrcp.pop 128.0
    %v998 = vmul.f32 %v990, %v997
    %v999 = vmul.f32 %v992, %v997
    %v1000 = vmul.f32 %v994, %v997
    %v1001 = vmul.f32 %v996, %v997
    %v1002 = vsub.f32 %v983, %v998
    %v1003 = vsub.f32 %v984, %v999
    %v1004 = vsub.f32 %v985, %v1000
    %v1005 = vsub.f32 %v986, %v1001
    %v1006 = vmul.f32 %v1002, %v1002
    %v1007 = vmul.f32 %v1003, %v1003
    %v1008 = vmul.f32 %v1004, %v1004
    %v1009 = vmul.f32 %v1005, %v1005
    %1010 = vadd.xlane.f32.xlu0 %v1006
    %v1011 = vpop.xlane.xlu0 %1010
    %1012 = vadd.xlane.f32.xlu0 %v1007
    %v1013 = vpop.xlane.xlu0 %1012
    %1014 = vadd.xlane.f32.xlu0 %v1008
    %v1015 = vpop.xlane.xlu0 %1014
    %1016 = vadd.xlane.f32.xlu0 %v1009
    %v1017 = vpop.xlane.xlu0 %1016
    %v1018 = vmul.f32 %v1011, %v997
    %v1019 = vmul.f32 %v1013, %v997
    %v1020 = vmul.f32 %v1015, %v997
    %v1021 = vmul.f32 %v1017, %v997
    %v1022 = vadd.f32 %v1018, 1e-05
    %v1023 = vadd.f32 %v1019, 1e-05
    %v1024 = vadd.f32 %v1020, 1e-05
    %v1025 = vadd.f32 %v1021, 1e-05
    %v1026 = vrsqrt.pop %v1022
    %v1027 = vrsqrt.pop %v1023
    %v1028 = vrsqrt.pop %v1024
    %v1029 = vrsqrt.pop %v1025
    %v1030 = vmul.f32 %v1002, %v1026
    %v1031 = vmul.f32 %v1003, %v1027
    %v1032 = vmul.f32 %v1004, %v1028
    %v1033 = vmul.f32 %v1005, %v1029
    %v1035 = vlaneseq
    %v1036 = vshrl.u32 %v1035, 7
    %v1037 = vsub.s32 0, %v1036
    %v1038 = vrot.slane %v987, %v1037
    %v1040 = vmul.f32 %v1030, %v1038
    %v1041 = vmul.f32 %v1031, %v1038
    %v1042 = vmul.f32 %v1032, %v1038
    %v1043 = vmul.f32 %v1033, %v1038
    %v1045 = vlaneseq
    %v1046 = vshrl.u32 %v1045, 7
    %v1047 = vsub.s32 0, %v1046
    %v1048 = vrot.slane %v988, %v1047
    %v1050 = vadd.f32 %v1040, %v1048
    %v1051 = vadd.f32 %v1041, %v1048
    %v1052 = vadd.f32 %v1042, %v1048
    %v1053 = vadd.f32 %v1043, %v1048
    %v1054 = vld [vmem:[#allocation11] sm:$0xff]
    %v1055 = vld [vmem:[#allocation11 + $0x8] sm:$0xff]
    %v1056 = vld [vmem:[#allocation11 + $0x10] sm:$0xff]
    %v1057 = vld [vmem:[#allocation11 + $0x18] sm:$0xff]
    %v1058 = vld [vmem:[#allocation11 + $0x20] sm:$0xff]
    %v1059 = vld [vmem:[#allocation11 + $0x28] sm:$0xff]
    %v1060 = vld [vmem:[#allocation11 + $0x30] sm:$0xff]
    %v1061 = vld [vmem:[#allocation11 + $0x38] sm:$0xff]
    %v1062 = vld [vmem:[#allocation11 + $0x40] sm:$0xff]
    %v1063 = vld [vmem:[#allocation11 + $0x48] sm:$0xff]
    %v1064 = vld [vmem:[#allocation11 + $0x50] sm:$0xff]
    %v1065 = vld [vmem:[#allocation11 + $0x58] sm:$0xff]
    %v1066 = vld [vmem:[#allocation11 + $0x60] sm:$0xff]
    %v1067 = vld [vmem:[#allocation11 + $0x68] sm:$0xff]
    %v1068 = vld [vmem:[#allocation11 + $0x70] sm:$0xff]
    %v1069 = vld [vmem:[#allocation11 + $0x78] sm:$0xff]
    %v1070 = vld [vmem:[%s11] sm:$0x1]
    %v1072 = vlaneseq
    %v1073 = vshrl.u32 %v1072, 7
    %v1074 = vsub.s32 0, %v1073
    %v1075 = vrot.slane %v1070, %v1074
    %1077 = vmatprep.subr.mxu0 0.0
    %1078 = vmatpush1.msra.mxu0 %v1054
    %1079 = vmatprep.subr.mxu0 0.0
    %1080 = vmatpush1.msra.mxu0 %v1055
    %1081 = vmatprep.subr.mxu0 0.0
    %1082 = vmatpush1.msra.mxu0 %v1056
    %1083 = vmatprep.subr.mxu0 0.0
    %1084 = vmatpush1.msra.mxu0 %v1057
    %1085 = vmatprep.subr.mxu0 0.0
    %1086 = vmatpush1.msra.mxu0 %v1058
    %1087 = vmatprep.subr.mxu0 0.0
    %1088 = vmatpush1.msra.mxu0 %v1059
    %1089 = vmatprep.subr.mxu0 0.0
    %1090 = vmatpush1.msra.mxu0 %v1060
    %1091 = vmatprep.subr.mxu0 0.0
    %1092 = vmatpush1.msra.mxu0 %v1061
    %1093 = vmatprep.subr.mxu0 0.0
    %1094 = vmatpush1.msra.mxu0 %v1062
    %1095 = vmatprep.subr.mxu0 0.0
    %1096 = vmatpush1.msra.mxu0 %v1063
    %1097 = vmatprep.subr.mxu0 0.0
    %1098 = vmatpush1.msra.mxu0 %v1064
    %1099 = vmatprep.subr.mxu0 0.0
    %1100 = vmatpush1.msra.mxu0 %v1065
    %1101 = vmatprep.subr.mxu0 0.0
    %1102 = vmatpush1.msra.mxu0 %v1066
    %1103 = vmatprep.subr.mxu0 0.0
    %1104 = vmatpush1.msra.mxu0 %v1067
    %1105 = vmatprep.subr.mxu0 0.0
    %1106 = vmatpush1.msra.mxu0 %v1068
    %1107 = vmatprep.subr.mxu0 0.0
    %1108 = vmatpush1.msra.mxu0 %v1069
    %1109 = vmatprep.subr.mxu0 0.0
    %1110 = vmatpush1.msra.mxu0 0.0
    %1111 = vmatprep.subr.mxu0 0.0
    %1112 = vmatpush1.msra.mxu0 0.0
    %1113 = vmatprep.subr.mxu0 0.0
    %1114 = vmatpush1.msra.mxu0 0.0
    %1115 = vmatprep.subr.mxu0 0.0
    %1116 = vmatpush1.msra.mxu0 0.0
    %1117 = vmatprep.subr.mxu0 0.0
    %1118 = vmatpush1.msra.mxu0 0.0
    %1119 = vmatprep.subr.mxu0 0.0
    %1120 = vmatpush1.msra.mxu0 0.0
    %1121 = vmatprep.subr.mxu0 0.0
    %1122 = vmatpush1.msra.mxu0 0.0
    %1123 = vmatprep.subr.mxu0 0.0
    %1124 = vmatpush1.msra.mxu0 0.0
    %1125 = vmatprep.subr.mxu0 0.0
    %1126 = vmatpush1.msra.mxu0 0.0
    %1127 = vmatprep.subr.mxu0 0.0
    %1128 = vmatpush1.msra.mxu0 0.0
    %1129 = vmatprep.subr.mxu0 0.0
    %1130 = vmatpush1.msra.mxu0 0.0
    %1131 = vmatprep.subr.mxu0 0.0
    %1132 = vmatpush1.msra.mxu0 0.0
    %1133 = vmatprep.subr.mxu0 0.0
    %1134 = vmatpush1.msra.mxu0 0.0
    %1135 = vmatprep.subr.mxu0 0.0
    %1136 = vmatpush1.msra.mxu0 0.0
    %1137 = vmatprep.subr.mxu0 0.0
    %1138 = vmatpush1.msra.mxu0 0.0
    %1139 = vmatprep.subr.mxu0 0.0
    %1140 = vmatpush1.msra.mxu0 0.0
    %1141 = vmatprep.mubr.f32.mxu0 0.0
    %1142 = vmatmul.mubr.f32.gmra.mrb[0].mxu0 %v1050
    %v1143 = vpop.f32.mrb[0].mxu0
    %v1144 = vadd.f32 %v1075, %v1143
    %v1145 = vpop.f32.mrb[0].mxu0
    %1146 = vmatprep.mubr.f32.mxu0 0.0
    %1147 = vmatmul.mubr.f32.gmra.mrb[0].mxu0 %v1051
    %v1148 = vpop.f32.mrb[0].mxu0
    %v1149 = vadd.f32 %v1075, %v1148
    %v1150 = vpop.f32.mrb[0].mxu0
    %1151 = vmatprep.mubr.f32.mxu0 0.0
    %1152 = vmatmul.mubr.f32.gmra.mrb[0].mxu0 %v1052
    %v1153 = vpop.f32.mrb[0].mxu0
    %v1154 = vadd.f32 %v1075, %v1153
    %v1155 = vpop.f32.mrb[0].mxu0
    %1156 = vmatprep.mubr.f32.mxu0 0.0
    %1157 = vmatmul.mubr.f32.gmra.mrb[0].mxu0 %v1053
    %v1158 = vpop.f32.mrb[0].mxu0
    %v1159 = vadd.f32 %v1075, %v1158
    %v1160 = vpop.f32.mrb[0].mxu0
    %1161 = vdwg.mxu0
    %v1162 = vmul.f32 %v1144, 0.5
    %v1163 = vmul.f32 %v1149, 0.5
    %v1164 = vmul.f32 %v1154, 0.5
    %v1165 = vmul.f32 %v1159, 0.5
    %v1166 = vmul.f32 %v1144, 0.70710677
    %v1167 = vmul.f32 %v1149, 0.70710677
    %v1168 = vmul.f32 %v1154, 0.70710677
    %v1169 = vmul.f32 %v1159, 0.70710677
    %v1170 = vand.u32 2147483647, %v1166
    %v1171 = vand.u32 2147483647, %v1167
    %v1172 = vand.u32 2147483647, %v1168
    %v1173 = vand.u32 2147483647, %v1169
    %v1174 = vmul.f32 %v1170, 0.3275911
    %v1175 = vmul.f32 %v1171, 0.3275911
    %v1176 = vmul.f32 %v1172, 0.3275911
    %v1177 = vmul.f32 %v1173, 0.3275911
    %v1178 = vadd.f32 %v1174, 1.0
    %v1179 = vadd.f32 %v1175, 1.0
    %v1180 = vadd.f32 %v1176, 1.0
    %v1181 = vadd.f32 %v1177, 1.0
    %v1182 = vrcp.pop %v1178
    %v1183 = vmul.f32 1.0, %v1182
    %v1184 = vrcp.pop %v1179
    %v1185 = vmul.f32 1.0, %v1184
    %v1186 = vrcp.pop %v1180
    %v1187 = vmul.f32 1.0, %v1186
    %v1188 = vrcp.pop %v1181
    %v1189 = vmul.f32 1.0, %v1188
    %v1190 = vmul.f32 %v1183, 1.0614054
    %v1191 = vmul.f32 %v1185, 1.0614054
    %v1192 = vmul.f32 %v1187, 1.0614054
    %v1193 = vmul.f32 %v1189, 1.0614054
    %v1194 = vadd.f32 %v1190, -1.4531521
    %v1195 = vadd.f32 %v1191, -1.4531521
    %v1196 = vadd.f32 %v1192, -1.4531521
    %v1197 = vadd.f32 %v1193, -1.4531521
    %v1198 = vmul.f32 %v1194, %v1183
    %v1199 = vmul.f32 %v1195, %v1185
    %v1200 = vmul.f32 %v1196, %v1187
    %v1201 = vmul.f32 %v1197, %v1189
    %v1202 = vadd.f32 %v1198, 1.4214138
    %v1203 = vadd.f32 %v1199, 1.4214138
    %v1204 = vadd.f32 %v1200, 1.4214138
    %v1205 = vadd.f32 %v1201, 1.4214138
    %v1206 = vmul.f32 %v1202, %v1183
    %v1207 = vmul.f32 %v1203, %v1185
    %v1208 = vmul.f32 %v1204, %v1187
    %v1209 = vmul.f32 %v1205, %v1189
    %v1210 = vadd.f32 %v1206, -0.28449672
    %v1211 = vadd.f32 %v1207, -0.28449672
    %v1212 = vadd.f32 %v1208, -0.28449672
    %v1213 = vadd.f32 %v1209, -0.28449672
    %v1214 = vmul.f32 %v1210, %v1183
    %v1215 = vmul.f32 %v1211, %v1185
    %v1216 = vmul.f32 %v1212, %v1187
    %v1217 = vmul.f32 %v1213, %v1189
    %v1218 = vadd.f32 %v1214, 0.2548296
    %v1219 = vadd.f32 %v1215, 0.2548296
    %v1220 = vadd.f32 %v1216, 0.2548296
    %v1221 = vadd.f32 %v1217, 0.2548296
    %v1222 = vmul.f32 %v1218, %v1183
    %v1223 = vmul.f32 %v1219, %v1185
    %v1224 = vmul.f32 %v1220, %v1187
    %v1225 = vmul.f32 %v1221, %v1189
    %v1226 = vsub.f32 0.0, %v1170
    %v1227 = vsub.f32 0.0, %v1171
    %v1228 = vsub.f32 0.0, %v1172
    %v1229 = vsub.f32 0.0, %v1173
    %v1230 = vmul.f32 %v1226, %v1170
    %v1231 = vmul.f32 %v1227, %v1171
    %v1232 = vmul.f32 %v1228, %v1172
    %v1233 = vmul.f32 %v1229, %v1173
    %v1234 = vmul.f32 %v1230, 1.442695
    %v1235 = vpow.pop %v1234
    %v1236 = vmul.f32 %v1231, 1.442695
    %v1237 = vpow.pop %v1236
    %v1238 = vmul.f32 %v1232, 1.442695
    %v1239 = vpow.pop %v1238
    %v1240 = vmul.f32 %v1233, 1.442695
    %v1241 = vpow.pop %v1240
    %v1242 = vmul.f32 %v1222, %v1235
    %v1243 = vmul.f32 %v1223, %v1237
    %v1244 = vmul.f32 %v1224, %v1239
    %v1245 = vmul.f32 %v1225, %v1241
    %v1246 = vsub.f32 1.0, %v1242
    %v1247 = vsub.f32 1.0, %v1243
    %v1248 = vsub.f32 1.0, %v1244
    %v1249 = vsub.f32 1.0, %v1245
    %vm1250 = vcmp.lt.f32.partialorder %v1166, 0.0
    %vm1251 = vcmp.lt.f32.partialorder %v1167, 0.0
    %vm1252 = vcmp.lt.f32.partialorder %v1168, 0.0
    %vm1253 = vcmp.lt.f32.partialorder %v1169, 0.0
    %v1254 = vsub.f32 0.0, %v1246
    %v1255 = vsub.f32 0.0, %v1247
    %v1256 = vsub.f32 0.0, %v1248
    %v1257 = vsub.f32 0.0, %v1249
    %v1258 = vsel %vm1250, %v1254, %v1246
    %v1259 = vsel %vm1251, %v1255, %v1247
    %v1260 = vsel %vm1252, %v1256, %v1248
    %v1261 = vsel %vm1253, %v1257, %v1249
    %v1262 = vadd.f32 %v1258, 1.0
    %v1263 = vadd.f32 %v1259, 1.0
    %v1264 = vadd.f32 %v1260, 1.0
    %v1265 = vadd.f32 %v1261, 1.0
    %v1266 = vmul.f32 %v1162, %v1262
    %v1267 = vmul.f32 %v1163, %v1263
    %v1268 = vmul.f32 %v1164, %v1264
    %v1269 = vmul.f32 %v1165, %v1265
    %v1270 = vld [vmem:[#allocation13] sm:$0xff]
    %v1271 = vld [vmem:[#allocation13 + $0x8] sm:$0xff]
    %v1272 = vld [vmem:[#allocation13 + $0x10] sm:$0xff]
    %v1273 = vld [vmem:[#allocation13 + $0x18] sm:$0xff]
    %v1274 = vld [vmem:[#allocation13 + $0x20] sm:$0xff]
    %v1275 = vld [vmem:[#allocation13 + $0x28] sm:$0xff]
    %v1276 = vld [vmem:[#allocation13 + $0x30] sm:$0xff]
    %v1277 = vld [vmem:[#allocation13 + $0x38] sm:$0xff]
    %v1278 = vld [vmem:[#allocation13 + $0x40] sm:$0xff]
    %v1279 = vld [vmem:[#allocation13 + $0x48] sm:$0xff]
    %v1280 = vld [vmem:[#allocation13 + $0x50] sm:$0xff]
    %v1281 = vld [vmem:[#allocation13 + $0x58] sm:$0xff]
    %v1282 = vld [vmem:[#allocation13 + $0x60] sm:$0xff]
    %v1283 = vld [vmem:[#allocation13 + $0x68] sm:$0xff]
    %v1284 = vld [vmem:[#allocation13 + $0x70] sm:$0xff]
    %v1285 = vld [vmem:[#allocation13 + $0x78] sm:$0xff]
    %v1286 = vld [vmem:[%s13] sm:$0x1]
    %v1288 = vlaneseq
    %v1289 = vshrl.u32 %v1288, 7
    %v1290 = vsub.s32 0, %v1289
    %v1291 = vrot.slane %v1286, %v1290
    %1293 = vmatprep.subr.mxu0 0.0
    %1294 = vmatpush1.msra.mxu0 %v1270
    %1295 = vmatprep.subr.mxu0 0.0
    %1296 = vmatpush1.msra.mxu0 %v1271
    %1297 = vmatprep.subr.mxu0 0.0
    %1298 = vmatpush1.msra.mxu0 %v1272
    %1299 = vmatprep.subr.mxu0 0.0
    %1300 = vmatpush1.msra.mxu0 %v1273
    %1301 = vmatprep.subr.mxu0 0.0
    %1302 = vmatpush1.msra.mxu0 %v1274
    %1303 = vmatprep.subr.mxu0 0.0
    %1304 = vmatpush1.msra.mxu0 %v1275
    %1305 = vmatprep.subr.mxu0 0.0
    %1306 = vmatpush1.msra.mxu0 %v1276
    %1307 = vmatprep.subr.mxu0 0.0
    %1308 = vmatpush1.msra.mxu0 %v1277
    %1309 = vmatprep.subr.mxu0 0.0
    %1310 = vmatpush1.msra.mxu0 %v1278
    %1311 = vmatprep.subr.mxu0 0.0
    %1312 = vmatpush1.msra.mxu0 %v1279
    %1313 = vmatprep.subr.mxu0 0.0
    %1314 = vmatpush1.msra.mxu0 %v1280
    %1315 = vmatprep.subr.mxu0 0.0
    %1316 = vmatpush1.msra.mxu0 %v1281
    %1317 = vmatprep.subr.mxu0 0.0
    %1318 = vmatpush1.msra.mxu0 %v1282
    %1319 = vmatprep.subr.mxu0 0.0
    %1320 = vmatpush1.msra.mxu0 %v1283
    %1321 = vmatprep.subr.mxu0 0.0
    %1322 = vmatpush1.msra.mxu0 %v1284
    %1323 = vmatprep.subr.mxu0 0.0
    %1324 = vmatpush1.msra.mxu0 %v1285
    %1325 = vmatprep.subr.mxu0 0.0
    %1326 = vmatpush1.msra.mxu0 0.0
    %1327 = vmatprep.subr.mxu0 0.0
    %1328 = vmatpush1.msra.mxu0 0.0
    %1329 = vmatprep.subr.mxu0 0.0
    %1330 = vmatpush1.msra.mxu0 0.0
    %1331 = vmatprep.subr.mxu0 0.0
    %1332 = vmatpush1.msra.mxu0 0.0
    %1333 = vmatprep.subr.mxu0 0.0
    %1334 = vmatpush1.msra.mxu0 0.0
    %1335 = vmatprep.subr.mxu0 0.0
    %1336 = vmatpush1.msra.mxu0 0.0
    %1337 = vmatprep.subr.mxu0 0.0
    %1338 = vmatpush1.msra.mxu0 0.0
    %1339 = vmatprep.subr.mxu0 0.0
    %1340 = vmatpush1.msra.mxu0 0.0
    %1341 = vmatprep.subr.mxu0 0.0
    %1342 = vmatpush1.msra.mxu0 0.0
    %1343 = vmatprep.subr.mxu0 0.0
    %1344 = vmatpush1.msra.mxu0 0.0
    %1345 = vmatprep.subr.mxu0 0.0
    %1346 = vmatpush1.msra.mxu0 0.0
    %1347 = vmatprep.subr.mxu0 0.0
    %1348 = vmatpush1.msra.mxu0 0.0
    %1349 = vmatprep.subr.mxu0 0.0
    %1350 = vmatpush1.msra.mxu0 0.0
    %1351 = vmatprep.subr.mxu0 0.0
    %1352 = vmatpush1.msra.mxu0 0.0
    %1353 = vmatprep.subr.mxu0 0.0
    %1354 = vmatpush1.msra.mxu0 0.0
    %1355 = vmatprep.subr.mxu0 0.0
    %1356 = vmatpush1.msra.mxu0 0.0
    %1357 = vmatprep.mubr.f32.mxu0 0.0
    %1358 = vmatmul.mubr.f32.gmra.mrb[0].mxu0 %v1266
    %v1359 = vpop.f32.mrb[0].mxu0
    %v1360 = vadd.f32 %v1291, %v1359
    %v1361 = vpop.f32.mrb[0].mxu0
    %1362 = vmatprep.mubr.f32.mxu0 0.0
    %1363 = vmatmul.mubr.f32.gmra.mrb[0].mxu0 %v1267
    %v1364 = vpop.f32.mrb[0].mxu0
    %v1365 = vadd.f32 %v1291, %v1364
    %v1366 = vpop.f32.mrb[0].mxu0
    %1367 = vmatprep.mubr.f32.mxu0 0.0
    %1368 = vmatmul.mubr.f32.gmra.mrb[0].mxu0 %v1268
    %v1369 = vpop.f32.mrb[0].mxu0
    %v1370 = vadd.f32 %v1291, %v1369
    %v1371 = vpop.f32.mrb[0].mxu0
    %1372 = vmatprep.mubr.f32.mxu0 0.0
    %1373 = vmatmul.mubr.f32.gmra.mrb[0].mxu0 %v1269
    %v1374 = vpop.f32.mrb[0].mxu0
    %v1375 = vadd.f32 %v1291, %v1374
    %v1376 = vpop.f32.mrb[0].mxu0
    %1377 = vdwg.mxu0
    %v1378 = vadd.f32 %v983, %v1360
    %v1379 = vadd.f32 %v984, %v1365
    %v1380 = vadd.f32 %v985, %v1370
    %v1381 = vadd.f32 %v986, %v1375
    %1382 = vst [vmem:[#allocation14] sm:$0xff] %v1378
    %1383 = vst [vmem:[#allocation14 + $0x8] sm:$0xff] %v1379
    %1384 = vst [vmem:[#allocation14 + $0x10] sm:$0xff] %v1380
    %1385 = vst [vmem:[#allocation14 + $0x18] sm:$0xff] %v1381
    // Predicated region
    $region86: #{tpu_custom_call.1} parent=1 // pred_check
      _
    $region87: #{tpu_custom_call.1} parent=1 // pred_check_branch
      %1387 = sbr.rel (0) target = $region89
    $region88: #{tpu_custom_call.1} parent=1 // pred_region
      %s1389 = ssub.s32 512, 512
      %1390 = vsyncadd [#allocation4], %s1389
      %s1391 = sshll.u32 [#allocation14], 4
      %s1392 = int_to_ptr.vmem [resolvable:$true] %s1391
      %1397 = dma.vmem_to_hbm [thread:$0]  %s1392, 512, %s14, [#allocation4], 128, 128, 8
    $region89: #{tpu_custom_call.1} parent=1 // pred_fallthru
      _
    // Predicated region
    $region90: #{tpu_custom_call.1} parent=1 // pred_check
      _
    $region91: #{tpu_custom_call.1} parent=1 // pred_check_branch
      %1399 = sbr.rel (0) target = $region93
    $region92: #{tpu_custom_call.1} parent=1 // pred_region
      %1400 = dma.done [#allocation4], 512
    $region93: #{tpu_custom_call.1} parent=1 // pred_fallthru
      _
    %1401 = vsyncpa [#allocation3], 1
    %1402 = vsyncpa [#allocation6], 1
    %1403 = vsyncpa [#allocation9], 1
    %1404 = vsyncpa [#allocation12], 1
    %1405 = vsyncpa [#allocation4], 1

</llo_original>
